<compile_context>
chip_gen: v7x
topology: tpu7x:2x2x1
jax: 0.10.0
libtpu: 0.0.40
codegen_flags: <defaults>
</compile_context>

<pallas_src>
import functools

import jax
import jax.numpy as jnp
from jax.experimental import pallas as pl
from jax.experimental.pallas import tpu as pltpu

BN_EPS = 0.001
_LANE = 128   # pad K and C_out up to multiples of the 128-lane vreg width
_TM = 256     # output rows (N*OH*OW) per grid step


def _round_up(x, m):
    return (x + m - 1) // m * m


def _stats_kernel(p_ref, w_ref, g_ref, b_ref, scale_ref, shift_ref,
                  s_acc, ss_acc, *, m_total):
    """Pass 1: accumulate per-channel sum(y) / sum(y*y) over all M tiles, then
    fold BN (training-mode biased batch stats) into per-channel scale/shift."""
    i = pl.program_id(0)

    @pl.when(i == 0)
    def _():
        s_acc[...] = jnp.zeros_like(s_acc)
        ss_acc[...] = jnp.zeros_like(ss_acc)

    # Conv tile on the MXU: bf16 inputs, f32 accumulation.
    y = jnp.dot(p_ref[...], w_ref[...], preferred_element_type=jnp.float32)
    s_acc[...] += jnp.sum(y, axis=0, keepdims=True)
    ss_acc[...] += jnp.sum(y * y, axis=0, keepdims=True)

    @pl.when(i == pl.num_programs(0) - 1)
    def _():
        inv_m = 1.0 / m_total
        mean = s_acc[...] * inv_m
        var = jnp.maximum(ss_acc[...] * inv_m - mean * mean, 0.0)
        inv_std = jax.lax.rsqrt(var + BN_EPS)
        scale = g_ref[...] * inv_std
        scale_ref[...] = scale
        shift_ref[...] = b_ref[...] - mean * scale


def _apply_kernel(p_ref, w_ref, scale_ref, shift_ref, o_ref):
    """Pass 2: recompute the conv tile, apply folded BN affine + ReLU."""
    y = jnp.dot(p_ref[...], w_ref[...], preferred_element_type=jnp.float32)
    o_ref[...] = jnp.maximum(y * scale_ref[...] + shift_ref[...], 0.0)


def _im2col_nhwc(x_nhwc, kh, kw, stride):
    """Extract conv patches. Returns (N*OH*OW, kh*kw*C), OH, OW."""
    N, H, W, C = x_nhwc.shape
    OH = (H - kh) // stride + 1
    OW = (W - kw) // stride + 1
    taps = []
    for i in range(kh):
        for j in range(kw):
            taps.append(
                x_nhwc[:, i:i + OH * stride:stride, j:j + OW * stride:stride, :]
            )  # (N, OH, OW, C)
    p = jnp.stack(taps, axis=3)                 # (N, OH, OW, kh*kw, C)
    return p.reshape(N * OH * OW, kh * kw * C), OH, OW


@functools.partial(jax.jit, static_argnames=("stride",))
def conv_bn_relu(x_nchw, weight_oihw, gamma, beta, *, stride=1):
    """relu(bn(conv(x))) with PyTorch layouts.

    x_nchw:      (N, C_in, H, W)        float32
    weight_oihw: (C_out, C_in, KH, KW)  float32
    gamma, beta: (C_out,)               float32
    Returns:     (N, C_out, OH, OW)     float32
    """
    N, C_in, H, W = x_nchw.shape
    C_out, _, KH, KW = weight_oihw.shape

    # Glue: NCHW -> NHWC, im2col (kept in the wrapper; see TODO below).
    # TODO(synk): fuse im2col into the kernel as KH*KW shifted matmuls to avoid
    # the KH*KW x HBM blowup for large spatial inputs.
    x_nhwc = jnp.transpose(x_nchw, (0, 2, 3, 1))
    patches, OH, OW = _im2col_nhwc(x_nhwc, KH, KW, stride)      # (M, K) f32
    M, K = patches.shape

    Kp = _round_up(K, _LANE)
    Cp = _round_up(C_out, _LANE)
    Mp = _round_up(M, _TM)
    n_tiles = Mp // _TM

    # Zero-pad to tile-aligned shapes. Zero rows/columns are inert for the conv
    # and for the batch statistics (we divide by the true M, not Mp).
    patches_p = jnp.zeros((Mp, Kp), jnp.bfloat16).at[:M, :K].set(
        patches.astype(jnp.bfloat16))
    w2d = jnp.transpose(weight_oihw, (2, 3, 1, 0)).reshape(K, C_out)
    w_p = jnp.zeros((Kp, Cp), jnp.bfloat16).at[:K, :C_out].set(
        w2d.astype(jnp.bfloat16))
    gamma_p = jnp.zeros((1, Cp), jnp.float32).at[0, :C_out].set(
        gamma.astype(jnp.float32))
    beta_p = jnp.zeros((1, Cp), jnp.float32).at[0, :C_out].set(
        beta.astype(jnp.float32))

    patch_spec = pl.BlockSpec((_TM, Kp), lambda i: (i, 0))
    w_spec = pl.BlockSpec((Kp, Cp), lambda i: (0, 0))      # resident weights
    vec_spec = pl.BlockSpec((1, Cp), lambda i: (0, 0))     # per-channel vectors

    vmem_limit = 32 * 1024 * 1024  # safe on v5e / v6e / v7x; tiles use << this

    # Pass 1: batch statistics -> folded (scale, shift). Reduction over M tiles.
    scale, shift = pl.pallas_call(
        functools.partial(_stats_kernel, m_total=float(M)),
        out_shape=(jax.ShapeDtypeStruct((1, Cp), jnp.float32),
                   jax.ShapeDtypeStruct((1, Cp), jnp.float32)),
        grid_spec=pltpu.PrefetchScalarGridSpec(
            num_scalar_prefetch=0,
            grid=(n_tiles,),
            in_specs=[patch_spec, w_spec, vec_spec, vec_spec],
            out_specs=(vec_spec, vec_spec),
            scratch_shapes=[pltpu.VMEM((1, Cp), jnp.float32),
                            pltpu.VMEM((1, Cp), jnp.float32)]),
        compiler_params=pltpu.CompilerParams(
            dimension_semantics=("arbitrary",),
            vmem_limit_bytes=vmem_limit),
    )(patches_p, w_p, gamma_p, beta_p)

    # Pass 2: conv + fused affine + ReLU. Independent M tiles -> "parallel".
    out_p = pl.pallas_call(
        _apply_kernel,
        out_shape=jax.ShapeDtypeStruct((Mp, Cp), jnp.float32),
        grid_spec=pltpu.PrefetchScalarGridSpec(
            num_scalar_prefetch=0,
            grid=(n_tiles,),
            in_specs=[patch_spec, w_spec, vec_spec, vec_spec],
            out_specs=pl.BlockSpec((_TM, Cp), lambda i: (i, 0))),
        compiler_params=pltpu.CompilerParams(
            dimension_semantics=("parallel",),
            vmem_limit_bytes=vmem_limit),
    )(patches_p, w_p, scale, shift)

    # (Mp, Cp) -> (M, C_out) -> (N, OH, OW, C_out) -> NCHW
    out = out_p[:M, :C_out].reshape(N, OH, OW, C_out)
    return jnp.transpose(out, (0, 3, 1, 2))


if __name__ == "__main__":
    # Conv_Bn_Relu(in_channels=4, out_channels=8, kernel_size=3, stride=1)
    # applied to x of shape (2, 4, 16, 16).
    N, C_IN, H, W = 2, 4, 16, 16
    C_OUT, KH, KW, STRIDE = 8, 3, 3, 1

    key = jax.random.PRNGKey(0)
    kx, kw_, kg, kb = jax.random.split(key, 4)

    x = jax.random.normal(kx, (N, C_IN, H, W), dtype=jnp.float32)
    fan_in = C_IN * KH * KW
    bound = 1.0 / (fan_in ** 0.5)
    weight = jax.random.uniform(
        kw_, (C_OUT, C_IN, KH, KW), minval=-bound, maxval=bound, dtype=jnp.float32
    )
    gamma = 1.0 + 0.1 * jax.random.normal(kg, (C_OUT,), dtype=jnp.float32)
    beta = 0.1 * jax.random.normal(kb, (C_OUT,), dtype=jnp.float32)

    out = conv_bn_relu(x, weight, gamma, beta, stride=STRIDE)
    jax.block_until_ready(out)
    assert out.shape == (N, C_OUT, H - KH + 1, W - KW + 1)
    assert bool(jnp.all(jnp.isfinite(out))) and bool(jnp.all(out >= 0.0))
    print("KERNEL_OK")
</pallas_src>

<mosaic_0001>
module attributes {stable_mosaic.version = 11 : i64} {
  func.func @_stats_kernel(%arg0: i32, %arg1: memref<256x128xbf16, #tpu.memory_space<vmem>>, %arg2: memref<128x128xbf16, #tpu.memory_space<vmem>>, %arg3: memref<1x128xf32, #tpu.memory_space<vmem>>, %arg4: memref<1x128xf32, #tpu.memory_space<vmem>>, %arg5: memref<1x128xf32, #tpu.memory_space<vmem>>, %arg6: memref<1x128xf32, #tpu.memory_space<vmem>>, %arg7: memref<1x128xf32, #tpu.memory_space<vmem>>, %arg8: memref<1x128xf32, #tpu.memory_space<vmem>>) attributes {dimension_semantics = [#tpu.dimension_semantics<arbitrary>], iteration_bounds = array<i64: 2>, scalar_prefetch = 0 : i64, scratch_operands = 2 : i64, tpu.core_type = #tpu.core_type<tc>, window_params = [{transform_indices = @transform_0, window_bounds = array<i64: 256, 128>}, {pipeline_mode = #tpu.pipeline_mode<synchronous>, transform_indices = @transform_1, window_bounds = array<i64: 128, 128>}, {pipeline_mode = #tpu.pipeline_mode<synchronous>, transform_indices = @transform_2, window_bounds = array<i64: 1, 128>}, {pipeline_mode = #tpu.pipeline_mode<synchronous>, transform_indices = @transform_3, window_bounds = array<i64: 1, 128>}, {pipeline_mode = #tpu.pipeline_mode<synchronous>, transform_indices = @transform_4, window_bounds = array<i64: 1, 128>}, {pipeline_mode = #tpu.pipeline_mode<synchronous>, transform_indices = @transform_5, window_bounds = array<i64: 1, 128>}]} {
    %c0_i32 = arith.constant 0 : i32
    %0 = arith.cmpi eq, %arg0, %c0_i32 : i32
    %1 = arith.extui %0 : i1 to i32
    %c0_i32_0 = arith.constant 0 : i32
    %2 = arith.cmpi ne, %1, %c0_i32_0 : i32
    scf.if %2 {
      %cst_15 = arith.constant 0.000000e+00 : f32
      %20 = vector.broadcast %cst_15 : f32 to vector<1x128xf32>
      %c0_16 = arith.constant 0 : index
      %c0_17 = arith.constant 0 : index
      %21 = vector.load %arg7[%c0_16, %c0_17] : memref<1x128xf32, #tpu.memory_space<vmem>>, vector<1x128xf32>
      tpu.vector_store %arg7[%c0_16, %c0_17], %20 {strides = array<i32>} : memref<1x128xf32, #tpu.memory_space<vmem>>, vector<1x128xf32>,
      %cst_18 = arith.constant 0.000000e+00 : f32
      %22 = vector.broadcast %cst_18 : f32 to vector<1x128xf32>
      %c0_19 = arith.constant 0 : index
      %c0_20 = arith.constant 0 : index
      %23 = vector.load %arg8[%c0_19, %c0_20] : memref<1x128xf32, #tpu.memory_space<vmem>>, vector<1x128xf32>
      tpu.vector_store %arg8[%c0_19, %c0_20], %22 {strides = array<i32>} : memref<1x128xf32, #tpu.memory_space<vmem>>, vector<1x128xf32>,
    } else {
    }
    %c0 = arith.constant 0 : index
    %c0_1 = arith.constant 0 : index
    %3 = vector.load %arg1[%c0, %c0_1] : memref<256x128xbf16, #tpu.memory_space<vmem>>, vector<256x128xbf16>
    %c0_2 = arith.constant 0 : index
    %c0_3 = arith.constant 0 : index
    %4 = vector.load %arg2[%c0_2, %c0_3] : memref<128x128xbf16, #tpu.memory_space<vmem>>, vector<128x128xbf16>
    %cst = arith.constant dense<0.000000e+00> : vector<256x128xf32>
    %5 = tpu.matmul %3, %4, %cst {dimension_numbers = #tpu.dot_dimension_numbers<[1], [0], [0], [1], [0, 0, 1, 1], [], []>} : vector<256x128xbf16>, vector<128x128xbf16>, vector<256x128xf32> -> vector<256x128xf32>
    %c0_4 = arith.constant 0 : index
    %c0_5 = arith.constant 0 : index
    %6 = vector.load %arg7[%c0_4, %c0_5] : memref<1x128xf32, #tpu.memory_space<vmem>>, vector<1x128xf32>
    %cst_6 = arith.constant dense<0.000000e+00> : vector<128xf32>
    %7 = vector.multi_reduction <add>, %5, %cst_6 [0] : vector<256x128xf32> to vector<128xf32>
    %8 = vector.shape_cast %7 : vector<128xf32> to vector<1x128xf32>
    %9 = arith.addf %6, %8 : vector<1x128xf32>
    %c0_7 = arith.constant 0 : index
    %c0_8 = arith.constant 0 : index
    %10 = vector.load %arg7[%c0_7, %c0_8] : memref<1x128xf32, #tpu.memory_space<vmem>>, vector<1x128xf32>
    tpu.vector_store %arg7[%c0_7, %c0_8], %9 {strides = array<i32>} : memref<1x128xf32, #tpu.memory_space<vmem>>, vector<1x128xf32>,
    %c0_9 = arith.constant 0 : index
    %c0_10 = arith.constant 0 : index
    %11 = vector.load %arg8[%c0_9, %c0_10] : memref<1x128xf32, #tpu.memory_space<vmem>>, vector<1x128xf32>
    %12 = arith.mulf %5, %5 : vector<256x128xf32>
    %cst_11 = arith.constant dense<0.000000e+00> : vector<128xf32>
    %13 = vector.multi_reduction <add>, %12, %cst_11 [0] : vector<256x128xf32> to vector<128xf32>
    %14 = vector.shape_cast %13 : vector<128xf32> to vector<1x128xf32>
    %15 = arith.addf %11, %14 : vector<1x128xf32>
    %c0_12 = arith.constant 0 : index
    %c0_13 = arith.constant 0 : index
    %16 = vector.load %arg8[%c0_12, %c0_13] : memref<1x128xf32, #tpu.memory_space<vmem>>, vector<1x128xf32>
    tpu.vector_store %arg8[%c0_12, %c0_13], %15 {strides = array<i32>} : memref<1x128xf32, #tpu.memory_space<vmem>>, vector<1x128xf32>,
    %c1_i32 = arith.constant 1 : i32
    %17 = arith.cmpi eq, %arg0, %c1_i32 : i32
    %18 = arith.extui %17 : i1 to i32
    %c0_i32_14 = arith.constant 0 : i32
    %19 = arith.cmpi ne, %18, %c0_i32_14 : i32
    scf.if %19 {
      %c0_15 = arith.constant 0 : index
      %c0_16 = arith.constant 0 : index
      %20 = vector.load %arg7[%c0_15, %c0_16] : memref<1x128xf32, #tpu.memory_space<vmem>>, vector<1x128xf32>
      %cst_17 = arith.constant 0.00255102036 : f32
      %21 = vector.broadcast %cst_17 : f32 to vector<1x128xf32>
      %22 = arith.mulf %20, %21 : vector<1x128xf32>
      %c0_18 = arith.constant 0 : index
      %c0_19 = arith.constant 0 : index
      %23 = vector.load %arg8[%c0_18, %c0_19] : memref<1x128xf32, #tpu.memory_space<vmem>>, vector<1x128xf32>
      %cst_20 = arith.constant 0.00255102036 : f32
      %24 = vector.broadcast %cst_20 : f32 to vector<1x128xf32>
      %25 = arith.mulf %23, %24 : vector<1x128xf32>
      %26 = arith.mulf %22, %22 : vector<1x128xf32>
      %27 = arith.subf %25, %26 : vector<1x128xf32>
      %cst_21 = arith.constant 0.000000e+00 : f32
      %28 = vector.broadcast %cst_21 : f32 to vector<1x128xf32>
      %29 = arith.maximumf %27, %28 : vector<1x128xf32>
      %cst_22 = arith.constant 1.000000e-03 : f32
      %30 = vector.broadcast %cst_22 : f32 to vector<1x128xf32>
      %31 = arith.addf %29, %30 : vector<1x128xf32>
      %32 = math.rsqrt %31 : vector<1x128xf32>
      %c0_23 = arith.constant 0 : index
      %c0_24 = arith.constant 0 : index
      %33 = vector.load %arg3[%c0_23, %c0_24] : memref<1x128xf32, #tpu.memory_space<vmem>>, vector<1x128xf32>
      %34 = arith.mulf %33, %32 : vector<1x128xf32>
      %c0_25 = arith.constant 0 : index
      %c0_26 = arith.constant 0 : index
      %35 = vector.load %arg5[%c0_25, %c0_26] : memref<1x128xf32, #tpu.memory_space<vmem>>, vector<1x128xf32>
      tpu.vector_store %arg5[%c0_25, %c0_26], %34 {strides = array<i32>} : memref<1x128xf32, #tpu.memory_space<vmem>>, vector<1x128xf32>,
      %c0_27 = arith.constant 0 : index
      %c0_28 = arith.constant 0 : index
      %36 = vector.load %arg4[%c0_27, %c0_28] : memref<1x128xf32, #tpu.memory_space<vmem>>, vector<1x128xf32>
      %37 = arith.mulf %22, %34 : vector<1x128xf32>
      %38 = arith.subf %36, %37 : vector<1x128xf32>
      %c0_29 = arith.constant 0 : index
      %c0_30 = arith.constant 0 : index
      %39 = vector.load %arg6[%c0_29, %c0_30] : memref<1x128xf32, #tpu.memory_space<vmem>>, vector<1x128xf32>
      tpu.vector_store %arg6[%c0_29, %c0_30], %38 {strides = array<i32>} : memref<1x128xf32, #tpu.memory_space<vmem>>, vector<1x128xf32>,
    } else {
    }
    return
  }
  func.func @transform_0(%arg0: i32) -> (i32, i32) {
    %c0_i32 = arith.constant 0 : i32
    %c0_i32_0 = arith.constant 0 : i32
    return %arg0, %c0_i32 : i32, i32
  }
  func.func @transform_1(%arg0: i32) -> (i32, i32) {
    %c0_i32 = arith.constant 0 : i32
    %c0_i32_0 = arith.constant 0 : i32
    %c0_i32_1 = arith.constant 0 : i32
    return %c0_i32, %c0_i32_0 : i32, i32
  }
  func.func @transform_2(%arg0: i32) -> (i32, i32) {
    %c0_i32 = arith.constant 0 : i32
    %c0_i32_0 = arith.constant 0 : i32
    %c0_i32_1 = arith.constant 0 : i32
    return %c0_i32, %c0_i32_0 : i32, i32
  }
  func.func @transform_3(%arg0: i32) -> (i32, i32) {
    %c0_i32 = arith.constant 0 : i32
    %c0_i32_0 = arith.constant 0 : i32
    %c0_i32_1 = arith.constant 0 : i32
    return %c0_i32, %c0_i32_0 : i32, i32
  }
  func.func @transform_4(%arg0: i32) -> (i32, i32) {
    %c0_i32 = arith.constant 0 : i32
    %c0_i32_0 = arith.constant 0 : i32
    %c0_i32_1 = arith.constant 0 : i32
    return %c0_i32, %c0_i32_0 : i32, i32
  }
  func.func @transform_5(%arg0: i32) -> (i32, i32) {
    %c0_i32 = arith.constant 0 : i32
    %c0_i32_0 = arith.constant 0 : i32
    %c0_i32_1 = arith.constant 0 : i32
    return %c0_i32, %c0_i32_0 : i32, i32
  }
}

module attributes {stable_mosaic.version = 11 : i64} {
  func.func @_apply_kernel(%arg0: i32, %arg1: memref<256x128xbf16, #tpu.memory_space<vmem>>, %arg2: memref<128x128xbf16, #tpu.memory_space<vmem>>, %arg3: memref<1x128xf32, #tpu.memory_space<vmem>>, %arg4: memref<1x128xf32, #tpu.memory_space<vmem>>, %arg5: memref<256x128xf32, #tpu.memory_space<vmem>>) attributes {dimension_semantics = [#tpu.dimension_semantics<parallel>], iteration_bounds = array<i64: 2>, scalar_prefetch = 0 : i64, scratch_operands = 0 : i64, tpu.core_type = #tpu.core_type<tc>, window_params = [{transform_indices = @transform_0, window_bounds = array<i64: 256, 128>}, {pipeline_mode = #tpu.pipeline_mode<synchronous>, transform_indices = @transform_1, window_bounds = array<i64: 128, 128>}, {pipeline_mode = #tpu.pipeline_mode<synchronous>, transform_indices = @transform_2, window_bounds = array<i64: 1, 128>}, {pipeline_mode = #tpu.pipeline_mode<synchronous>, transform_indices = @transform_3, window_bounds = array<i64: 1, 128>}, {transform_indices = @transform_4, window_bounds = array<i64: 256, 128>}]} {
    %c0 = arith.constant 0 : index
    %c0_0 = arith.constant 0 : index
    %0 = vector.load %arg1[%c0, %c0_0] : memref<256x128xbf16, #tpu.memory_space<vmem>>, vector<256x128xbf16>
    %c0_1 = arith.constant 0 : index
    %c0_2 = arith.constant 0 : index
    %1 = vector.load %arg2[%c0_1, %c0_2] : memref<128x128xbf16, #tpu.memory_space<vmem>>, vector<128x128xbf16>
    %cst = arith.constant dense<0.000000e+00> : vector<256x128xf32>
    %2 = tpu.matmul %0, %1, %cst {dimension_numbers = #tpu.dot_dimension_numbers<[1], [0], [0], [1], [0, 0, 1, 1], [], []>} : vector<256x128xbf16>, vector<128x128xbf16>, vector<256x128xf32> -> vector<256x128xf32>
    %c0_3 = arith.constant 0 : index
    %c0_4 = arith.constant 0 : index
    %3 = vector.load %arg3[%c0_3, %c0_4] : memref<1x128xf32, #tpu.memory_space<vmem>>, vector<1x128xf32>
    %4 = vector.broadcast %3 : vector<1x128xf32> to vector<256x128xf32>
    %5 = arith.mulf %2, %4 : vector<256x128xf32>
    %c0_5 = arith.constant 0 : index
    %c0_6 = arith.constant 0 : index
    %6 = vector.load %arg4[%c0_5, %c0_6] : memref<1x128xf32, #tpu.memory_space<vmem>>, vector<1x128xf32>
    %7 = vector.broadcast %6 : vector<1x128xf32> to vector<256x128xf32>
    %8 = arith.addf %5, %7 : vector<256x128xf32>
    %cst_7 = arith.constant 0.000000e+00 : f32
    %9 = vector.broadcast %cst_7 : f32 to vector<256x128xf32>
    %10 = arith.maximumf %8, %9 : vector<256x128xf32>
    %c0_8 = arith.constant 0 : index
    %c0_9 = arith.constant 0 : index
    %11 = vector.load %arg5[%c0_8, %c0_9] : memref<256x128xf32, #tpu.memory_space<vmem>>, vector<256x128xf32>
    tpu.vector_store %arg5[%c0_8, %c0_9], %10 {strides = array<i32>} : memref<256x128xf32, #tpu.memory_space<vmem>>, vector<256x128xf32>,
    return
  }
  func.func @transform_0(%arg0: i32) -> (i32, i32) {
    %c0_i32 = arith.constant 0 : i32
    %c0_i32_0 = arith.constant 0 : i32
    return %arg0, %c0_i32 : i32, i32
  }
  func.func @transform_1(%arg0: i32) -> (i32, i32) {
    %c0_i32 = arith.constant 0 : i32
    %c0_i32_0 = arith.constant 0 : i32
    %c0_i32_1 = arith.constant 0 : i32
    return %c0_i32, %c0_i32_0 : i32, i32
  }
  func.func @transform_2(%arg0: i32) -> (i32, i32) {
    %c0_i32 = arith.constant 0 : i32
    %c0_i32_0 = arith.constant 0 : i32
    %c0_i32_1 = arith.constant 0 : i32
    return %c0_i32, %c0_i32_0 : i32, i32
  }
  func.func @transform_3(%arg0: i32) -> (i32, i32) {
    %c0_i32 = arith.constant 0 : i32
    %c0_i32_0 = arith.constant 0 : i32
    %c0_i32_1 = arith.constant 0 : i32
    return %c0_i32, %c0_i32_0 : i32, i32
  }
  func.func @transform_4(%arg0: i32) -> (i32, i32) {
    %c0_i32 = arith.constant 0 : i32
    %c0_i32_0 = arith.constant 0 : i32
    return %arg0, %c0_i32 : i32, i32
  }
}

</mosaic_0001>

<llo_original>
// kernel: conv_bn_relu.3
$region0: #{conv_bn_relu.3}
  #allocation0 [shape = 'u32[]', space=smem, size = 0x4, offset = 0x4, fixed_abs, tag = 'smem constant byte address 0x4 - core index']
  #allocation1 [shape = 'u32[144,128]{1,0:T(1,128)}', space=vmem, size = 0x12000, scoped, tag = 'internal scratch']
  %s0 = inlined_call_operand.vmem [shape: bf16[512,128], index: 0, kind: input, shape index: {}]
  %s1 = inlined_call_operand.vmem [shape: bf16[128,128], index: 1, kind: input, shape index: {}]
  %s2 = inlined_call_operand.vmem [shape: f32[1,128], index: 2, kind: input, shape index: {}]
  %s3 = inlined_call_operand.vmem [shape: f32[1,128], index: 3, kind: input, shape index: {}]
  %s4 = inlined_call_operand.vmem [shape: f32[512,128], index: 4, kind: output, shape index: {}]
  %s5 = sld [smem:[#allocation0]]
  $region49: #{conv_bn_relu.3} parent=0
    _
  %s7 = ssub.s32 1, %s5
  %s8 = scalar_select 0, %s7, %s5
  loop: start=0, step=1, limit=4
  $region2: #{conv_bn_relu.3} parent=0 // loop_pre_header
    _
  $region3: #{conv_bn_relu.3} parent=0 // loop_header
    %s10 = sphi 0, %s14
    %p11 = scmp.ge.s32.totalorder %s10, 4
    %s20 = sphi 0, %s22
    %s23 = sphi 0, %s20
    %s24 = sphi 0, %s23
    %s40 = sphi 0, %s24
    %s44 = sphi 0, %s44
    %s46 = sphi 0, %s44
    %s47 = sphi 0, %s46
    %s61 = sphi 0, %s47
    %s65 = sphi 0, %s65
    %s67 = sphi 0, %s65
    %s68 = sphi 0, %s67
    %s82 = sphi 0, %s68
    %s86 = sphi 0, %s86
    %s88 = sphi 0, %s86
    %s89 = sphi 0, %s88
    %s103 = sphi 0, %s89
    %s109 = sphi 0, %s111
    %s112 = sphi 0, %s109
    %s113 = sphi 0, %s112
    %s129 = sphi 0, %s113
  $region4: #{conv_bn_relu.3} parent=0 // loop_header_branch
    %13 = sbr.rel (%p11) target = $region8
  $region5: #{conv_bn_relu.3} parent=0 // loop_body
    %s15 = ssub.s32 %s10, 1
    %s16 = ssub.s32 %s10, 2
    %s17 = sadd.s32 %s10, 1
    %s18 = ssub.s32 %s10, %s17
    %p19 = scmp.eq.s32.totalorder %s18, 0
    %s21 = sadd.s32 %s20, 1
    %s22 = scalar_select %p19, %s20, %s21
    %p25 = pneg %p19
    %p26 = scmp.eq.s32.totalorder %s10, 1
    %p27 = por %p25, %p26
    %p28 = scmp.ne.s32.totalorder %s20, %s23
    %p29 = scmp.eq.s32.totalorder %s10, 0
    %p30 = por %p28, %p29
    %p31 = scmp.ne.s32.totalorder %s20, %s23
    %p32 = scmp.eq.s32.totalorder %s15, 1
    %p33 = por %p31, %p32
    %p34 = scmp.ne.s32.totalorder %s23, %s24
    %p35 = scmp.eq.s32.totalorder %s15, 0
    %p36 = por %p34, %p35
    %p37 = scmp.ne.s32.totalorder %s23, %s24
    %p38 = scmp.eq.s32.totalorder %s16, 1
    %p39 = por %p37, %p38
    %p41 = scmp.ne.s32.totalorder %s24, %s40
    %p42 = scmp.eq.s32.totalorder %s16, 0
    %p43 = por %p41, %p42
    %s45 = sadd.s32 %s44, 1
    %p48 = scmp.eq.s32.totalorder %s10, 1
    %p49 = scmp.ne.s32.totalorder %s44, %s46
    %p50 = scmp.eq.s32.totalorder %s10, 0
    %p51 = por %p49, %p50
    %p52 = scmp.ne.s32.totalorder %s44, %s46
    %p53 = scmp.eq.s32.totalorder %s15, 1
    %p54 = por %p52, %p53
    %p55 = scmp.ne.s32.totalorder %s46, %s47
    %p56 = scmp.eq.s32.totalorder %s15, 0
    %p57 = por %p55, %p56
    %p58 = scmp.ne.s32.totalorder %s46, %s47
    %p59 = scmp.eq.s32.totalorder %s16, 1
    %p60 = por %p58, %p59
    %p62 = scmp.ne.s32.totalorder %s47, %s61
    %p63 = scmp.eq.s32.totalorder %s16, 0
    %p64 = por %p62, %p63
    %s66 = sadd.s32 %s65, 1
    %p69 = scmp.eq.s32.totalorder %s10, 1
    %p70 = scmp.ne.s32.totalorder %s65, %s67
    %p71 = scmp.eq.s32.totalorder %s10, 0
    %p72 = por %p70, %p71
    %p73 = scmp.ne.s32.totalorder %s65, %s67
    %p74 = scmp.eq.s32.totalorder %s15, 1
    %p75 = por %p73, %p74
    %p76 = scmp.ne.s32.totalorder %s67, %s68
    %p77 = scmp.eq.s32.totalorder %s15, 0
    %p78 = por %p76, %p77
    %p79 = scmp.ne.s32.totalorder %s67, %s68
    %p80 = scmp.eq.s32.totalorder %s16, 1
    %p81 = por %p79, %p80
    %p83 = scmp.ne.s32.totalorder %s68, %s82
    %p84 = scmp.eq.s32.totalorder %s16, 0
    %p85 = por %p83, %p84
    %s87 = sadd.s32 %s86, 1
    %p90 = scmp.eq.s32.totalorder %s10, 1
    %p91 = scmp.ne.s32.totalorder %s86, %s88
    %p92 = scmp.eq.s32.totalorder %s10, 0
    %p93 = por %p91, %p92
    %p94 = scmp.ne.s32.totalorder %s86, %s88
    %p95 = scmp.eq.s32.totalorder %s15, 1
    %p96 = por %p94, %p95
    %p97 = scmp.ne.s32.totalorder %s88, %s89
    %p98 = scmp.eq.s32.totalorder %s15, 0
    %p99 = por %p97, %p98
    %p100 = scmp.ne.s32.totalorder %s88, %s89
    %p101 = scmp.eq.s32.totalorder %s16, 1
    %p102 = por %p100, %p101
    %p104 = scmp.ne.s32.totalorder %s89, %s103
    %p105 = scmp.eq.s32.totalorder %s16, 0
    %p106 = por %p104, %p105
    %s107 = ssub.s32 %s10, %s17
    %p108 = scmp.eq.s32.totalorder %s107, 0
    %s110 = sadd.s32 %s109, 1
    %s111 = scalar_select %p108, %s109, %s110
    %p114 = pneg %p108
    %p115 = scmp.eq.s32.totalorder %s10, 1
    %p116 = por %p114, %p115
    %p117 = scmp.ne.s32.totalorder %s109, %s112
    %p118 = scmp.eq.s32.totalorder %s10, 0
    %p119 = por %p117, %p118
    %p120 = scmp.ne.s32.totalorder %s109, %s112
    %p121 = scmp.eq.s32.totalorder %s15, 1
    %p122 = por %p120, %p121
    %p123 = scmp.ne.s32.totalorder %s112, %s113
    %p124 = scmp.eq.s32.totalorder %s15, 0
    %p125 = por %p123, %p124
    %p126 = scmp.ne.s32.totalorder %s112, %s113
    %p127 = scmp.eq.s32.totalorder %s16, 1
    %p128 = por %p126, %p127
    %p130 = scmp.ne.s32.totalorder %s113, %s129
    %p131 = scmp.eq.s32.totalorder %s16, 0
    %p132 = por %p130, %p131
    %p133 = scmp.le.s32.totalorder 1, %s10
    %p134 = scmp.lt.s32.totalorder %s10, 3
    %p135 = pnand %p133, %p134
    %p136 = pneg %p135
    // Predicated region
    $region9: #{conv_bn_relu.3} parent=5 // pred_check
      _
    $region10: #{conv_bn_relu.3} parent=5 // pred_check_branch
      %138 = sbr.rel (%p135) target = $region12
    $region11: #{conv_bn_relu.3} parent=5 // pred_region
      %s139 = ssub.s32 %s10, 1
      // Predicated region
      $region13: #{conv_bn_relu.3} parent=11 // pred_check
        %p140 = pneg %p57
      $region14: #{conv_bn_relu.3} parent=11 // pred_check_branch
        %142 = sbr.rel (%p140) target = $region16
      $region15: #{conv_bn_relu.3} parent=11 // pred_region
        _
      $region16: #{conv_bn_relu.3} parent=11 // pred_fallthru
        _
      // Predicated region
      $region17: #{conv_bn_relu.3} parent=11 // pred_check
        %p143 = pneg %p78
      $region18: #{conv_bn_relu.3} parent=11 // pred_check_branch
        %145 = sbr.rel (%p143) target = $region20
      $region19: #{conv_bn_relu.3} parent=11 // pred_region
        _
      $region20: #{conv_bn_relu.3} parent=11 // pred_fallthru
        _
      // Predicated region
      $region21: #{conv_bn_relu.3} parent=11 // pred_check
        %p146 = pneg %p99
      $region22: #{conv_bn_relu.3} parent=11 // pred_check_branch
        %148 = sbr.rel (%p146) target = $region24
      $region23: #{conv_bn_relu.3} parent=11 // pred_region
        _
      $region24: #{conv_bn_relu.3} parent=11 // pred_fallthru
        _
    $region12: #{conv_bn_relu.3} parent=5 // pred_fallthru
      _
    %p149 = scmp.lt.s32.totalorder %s10, 2
    // Predicated region
    $region25: #{conv_bn_relu.3} parent=5 // pred_check
      %p150 = pneg %p149
    $region26: #{conv_bn_relu.3} parent=5 // pred_check_branch
      %152 = sbr.rel (%p150) target = $region28
    $region27: #{conv_bn_relu.3} parent=5 // pred_region
      // Predicated region
      $region29: #{conv_bn_relu.3} parent=27 // pred_check
        %p153 = pneg %p30
      $region30: #{conv_bn_relu.3} parent=27 // pred_check_branch
        %155 = sbr.rel (%p153) target = $region32
      $region31: #{conv_bn_relu.3} parent=27 // pred_region
        %s156 = smul.u32 32, %s10
        %p157 = scmp.lt.s32.totalorder %s156, 63
        %s158 = scalar_select %p157, %s156, 63
        %s159 = smul.addr %s158, 4
        %s160 = scalar_lea.vmem %s0, %s159
        %s161 = smul.u32 32, %s10
      $region32: #{conv_bn_relu.3} parent=27 // pred_fallthru
        _
    $region28: #{conv_bn_relu.3} parent=5 // pred_fallthru
      _
    %p162 = scmp.le.s32.totalorder 1, %s10
    %p163 = scmp.lt.s32.totalorder %s10, 3
    %p164 = pnand %p162, %p163
    %p165 = pneg %p164
    // Predicated region
    $region33: #{conv_bn_relu.3} parent=5 // pred_check
      _
    $region34: #{conv_bn_relu.3} parent=5 // pred_check_branch
      %167 = sbr.rel (%p164) target = $region36
    $region35: #{conv_bn_relu.3} parent=5 // pred_region
      %s168 = ssub.s32 %s10, 1
      %s169 = smul.u32 32, %s15
      %p170 = scmp.lt.s32.totalorder %s169, 63
      %s171 = scalar_select %p170, %s169, 63
      %s172 = smul.addr %s171, 4
      %s173 = scalar_lea.vmem %s0, %s172
      %p174 = pneg %p36
      %p175 = pneg %p33
      %p176 = pneg %p57
      %p177 = pneg %p54
      %p178 = pneg %p78
      %p179 = pneg %p75
      %p180 = pneg %p99
      %p181 = pneg %p96
      %p182 = pneg %p125
      %p183 = pneg %p122
      %s184 = smul.u32 32, %s15
      %p185 = scmp.lt.s32.totalorder %s184, 63
      %s186 = scalar_select %p185, %s184, 63
      %s187 = smul.addr %s186, 8
      %s188 = scalar_lea.vmem %s4, %s187
      %s189 = smul.u32 32, %s15
      %p190 = scmp.lt.s32.totalorder %s189, 63
      %s191 = scalar_select %p190, %s189, 63
      %s192 = smul.addr %s191, 4
      %s193 = scalar_lea.vmem %s0, %s192
      %s194 = smul.u32 32, %s15
      %s195 = smul.u32 32, %s15
      %p196 = scmp.lt.s32.totalorder %s195, 63
      %s197 = scalar_select %p196, %s195, 63
      %s198 = smul.addr %s197, 8
      %s199 = scalar_lea.vmem %s4, %s198
      %s200 = smul.u32 32, %s15
      %v202 = vld [vmem:[%s193] sm:$0xf]
      %v203 = vld [vmem:[%s193 + $0x4] sm:$0xf]
      %v204 = vld [vmem:[%s193 + $0x8] sm:$0xf]
      %v205 = vld [vmem:[%s193 + $0xc] sm:$0xf]
      %v206 = vld [vmem:[%s193 + $0x10] sm:$0xf]
      %v207 = vld [vmem:[%s193 + $0x14] sm:$0xf]
      %v208 = vld [vmem:[%s193 + $0x18] sm:$0xf]
      %v209 = vld [vmem:[%s193 + $0x1c] sm:$0xf]
      %v210 = vld [vmem:[%s193 + $0x20] sm:$0xf]
      %v211 = vld [vmem:[%s193 + $0x24] sm:$0xf]
      %v212 = vld [vmem:[%s193 + $0x28] sm:$0xf]
      %v213 = vld [vmem:[%s193 + $0x2c] sm:$0xf]
      %v214 = vld [vmem:[%s193 + $0x30] sm:$0xf]
      %v215 = vld [vmem:[%s193 + $0x34] sm:$0xf]
      %v216 = vld [vmem:[%s193 + $0x38] sm:$0xf]
      %v217 = vld [vmem:[%s193 + $0x3c] sm:$0xf]
      %v218 = vld [vmem:[%s193 + $0x40] sm:$0xf]
      %v219 = vld [vmem:[%s193 + $0x44] sm:$0xf]
      %v220 = vld [vmem:[%s193 + $0x48] sm:$0xf]
      %v221 = vld [vmem:[%s193 + $0x4c] sm:$0xf]
      %v222 = vld [vmem:[%s193 + $0x50] sm:$0xf]
      %v223 = vld [vmem:[%s193 + $0x54] sm:$0xf]
      %v224 = vld [vmem:[%s193 + $0x58] sm:$0xf]
      %v225 = vld [vmem:[%s193 + $0x5c] sm:$0xf]
      %v226 = vld [vmem:[%s193 + $0x60] sm:$0xf]
      %v227 = vld [vmem:[%s193 + $0x64] sm:$0xf]
      %v228 = vld [vmem:[%s193 + $0x68] sm:$0xf]
      %v229 = vld [vmem:[%s193 + $0x6c] sm:$0xf]
      %v230 = vld [vmem:[%s193 + $0x70] sm:$0xf]
      %v231 = vld [vmem:[%s193 + $0x74] sm:$0xf]
      %v232 = vld [vmem:[%s193 + $0x78] sm:$0xf]
      %v233 = vld [vmem:[%s193 + $0x7c] sm:$0xf]
      %v234 = vld [vmem:[%s1] sm:$0xf]
      %v235 = vld [vmem:[%s1 + $0x4] sm:$0xf]
      %v236 = vld [vmem:[%s1 + $0x8] sm:$0xf]
      %v237 = vld [vmem:[%s1 + $0xc] sm:$0xf]
      %v238 = vld [vmem:[%s1 + $0x10] sm:$0xf]
      %v239 = vld [vmem:[%s1 + $0x14] sm:$0xf]
      %v240 = vld [vmem:[%s1 + $0x18] sm:$0xf]
      %v241 = vld [vmem:[%s1 + $0x1c] sm:$0xf]
      %v242 = vld [vmem:[%s1 + $0x20] sm:$0xf]
      %v243 = vld [vmem:[%s1 + $0x24] sm:$0xf]
      %v244 = vld [vmem:[%s1 + $0x28] sm:$0xf]
      %v245 = vld [vmem:[%s1 + $0x2c] sm:$0xf]
      %v246 = vld [vmem:[%s1 + $0x30] sm:$0xf]
      %v247 = vld [vmem:[%s1 + $0x34] sm:$0xf]
      %v248 = vld [vmem:[%s1 + $0x38] sm:$0xf]
      %v249 = vld [vmem:[%s1 + $0x3c] sm:$0xf]
      %v282 = vunpack.c.l.b16 %v202
      %v283 = vunpack.c.l.b16 %v203
      %v284 = vunpack.c.l.b16 %v204
      %v285 = vunpack.c.l.b16 %v205
      %v286 = vunpack.c.l.b16 %v206
      %v287 = vunpack.c.l.b16 %v207
      %v288 = vunpack.c.l.b16 %v208
      %v289 = vunpack.c.l.b16 %v209
      %v290 = vunpack.c.l.b16 %v210
      %v291 = vunpack.c.l.b16 %v211
      %v292 = vunpack.c.l.b16 %v212
      %v293 = vunpack.c.l.b16 %v213
      %v294 = vunpack.c.l.b16 %v214
      %v295 = vunpack.c.l.b16 %v215
      %v296 = vunpack.c.l.b16 %v216
      %v297 = vunpack.c.l.b16 %v217
      %v298 = vunpack.c.l.b16 %v218
      %v299 = vunpack.c.l.b16 %v219
      %v300 = vunpack.c.l.b16 %v220
      %v301 = vunpack.c.l.b16 %v221
      %v302 = vunpack.c.l.b16 %v222
      %v303 = vunpack.c.l.b16 %v223
      %v304 = vunpack.c.l.b16 %v224
      %v305 = vunpack.c.l.b16 %v225
      %v306 = vunpack.c.l.b16 %v226
      %v307 = vunpack.c.l.b16 %v227
      %v308 = vunpack.c.l.b16 %v228
      %v309 = vunpack.c.l.b16 %v229
      %v310 = vunpack.c.l.b16 %v230
      %v311 = vunpack.c.l.b16 %v231
      %v312 = vunpack.c.l.b16 %v232
      %v313 = vunpack.c.l.b16 %v233
      %v314 = vpack.c.b16 %v283, %v282
      %v315 = vpack.c.b16 %v285, %v284
      %v316 = vpack.c.b16 %v287, %v286
      %v317 = vpack.c.b16 %v289, %v288
      %v318 = vpack.c.b16 %v291, %v290
      %v319 = vpack.c.b16 %v293, %v292
      %v320 = vpack.c.b16 %v295, %v294
      %v321 = vpack.c.b16 %v297, %v296
      %v322 = vpack.c.b16 %v299, %v298
      %v323 = vpack.c.b16 %v301, %v300
      %v324 = vpack.c.b16 %v303, %v302
      %v325 = vpack.c.b16 %v305, %v304
      %v326 = vpack.c.b16 %v307, %v306
      %v327 = vpack.c.b16 %v309, %v308
      %v328 = vpack.c.b16 %v311, %v310
      %v329 = vpack.c.b16 %v313, %v312
      %v362 = vunpack.c.l.b16 %v234
      %v363 = vunpack.c.l.b16 %v235
      %v364 = vunpack.c.l.b16 %v236
      %v365 = vunpack.c.l.b16 %v237
      %v366 = vunpack.c.l.b16 %v238
      %v367 = vunpack.c.l.b16 %v239
      %v368 = vunpack.c.l.b16 %v240
      %v369 = vunpack.c.l.b16 %v241
      %v370 = vunpack.c.l.b16 %v242
      %v371 = vunpack.c.l.b16 %v243
      %v372 = vunpack.c.l.b16 %v244
      %v373 = vunpack.c.l.b16 %v245
      %v374 = vunpack.c.l.b16 %v246
      %v375 = vunpack.c.l.b16 %v247
      %v376 = vunpack.c.l.b16 %v248
      %v377 = vunpack.c.l.b16 %v249
      %v378 = vpack.c.b16 %v363, %v362
      %v379 = vpack.c.b16 %v365, %v364
      %v380 = vpack.c.b16 %v367, %v366
      %v381 = vpack.c.b16 %v369, %v368
      %v382 = vpack.c.b16 %v371, %v370
      %v383 = vpack.c.b16 %v373, %v372
      %v384 = vpack.c.b16 %v375, %v374
      %v385 = vpack.c.b16 %v377, %v376
      %394 = vmatprep.subr.bf16.mxu0 0
      %395 = vmatpush1.bf16.msra.mxu0 %v378
      %396 = vmatprep.subr.bf16.mxu0 0
      %397 = vmatpush1.bf16.msra.mxu0 %v379
      %398 = vmatprep.subr.bf16.mxu0 0
      %399 = vmatpush1.bf16.msra.mxu0 %v380
      %400 = vmatprep.subr.bf16.mxu0 0
      %401 = vmatpush1.bf16.msra.mxu0 %v381
      %402 = vmatprep.subr.bf16.mxu0 0
      %403 = vmatpush1.bf16.msra.mxu0 %v382
      %404 = vmatprep.subr.bf16.mxu0 0
      %405 = vmatpush1.bf16.msra.mxu0 %v383
      %406 = vmatprep.subr.bf16.mxu0 0
      %407 = vmatpush1.bf16.msra.mxu0 %v384
      %408 = vmatprep.subr.bf16.mxu0 0
      %409 = vmatpush1.bf16.msra.mxu0 %v385
      %410 = vmatprep.subr.bf16.mxu0 0
      %411 = vmatpush1.bf16.msra.mxu0 0
      %412 = vmatprep.subr.bf16.mxu0 0
      %413 = vmatpush1.bf16.msra.mxu0 0
      %414 = vmatprep.subr.bf16.mxu0 0
      %415 = vmatpush1.bf16.msra.mxu0 0
      %416 = vmatprep.subr.bf16.mxu0 0
      %417 = vmatpush1.bf16.msra.mxu0 0
      %418 = vmatprep.subr.bf16.mxu0 0
      %419 = vmatpush1.bf16.msra.mxu0 0
      %420 = vmatprep.subr.bf16.mxu0 0
      %421 = vmatpush1.bf16.msra.mxu0 0
      %422 = vmatprep.subr.bf16.mxu0 0
      %423 = vmatpush1.bf16.msra.mxu0 0
      %424 = vmatprep.subr.bf16.mxu0 0
      %425 = vmatpush1.bf16.msra.mxu0 0
      %426 = vmatprep.mubr.bf16.mxu0 0
      %427 = vmatmul.mubr.bf16.gmra.mrb[0].mxu0 %v314
      %v428 = vpop.f32.mrb[0].mxu0
      %v429 = vadd.f32 0.0, %v428
      %v430 = vpop.f32.mrb[0].mxu0
      %v431 = vpop.f32.mrb[0].mxu0
      %v432 = vadd.f32 0.0, %v431
      %v433 = vpop.f32.mrb[0].mxu0
      %434 = vmatprep.mubr.bf16.mxu0 0
      %435 = vmatmul.mubr.bf16.gmra.mrb[0].mxu0 %v315
      %v436 = vpop.f32.mrb[0].mxu0
      %v437 = vadd.f32 0.0, %v436
      %v438 = vpop.f32.mrb[0].mxu0
      %v439 = vpop.f32.mrb[0].mxu0
      %v440 = vadd.f32 0.0, %v439
      %v441 = vpop.f32.mrb[0].mxu0
      %442 = vmatprep.mubr.bf16.mxu0 0
      %443 = vmatmul.mubr.bf16.gmra.mrb[0].mxu0 %v316
      %v444 = vpop.f32.mrb[0].mxu0
      %v445 = vadd.f32 0.0, %v444
      %v446 = vpop.f32.mrb[0].mxu0
      %v447 = vpop.f32.mrb[0].mxu0
      %v448 = vadd.f32 0.0, %v447
      %v449 = vpop.f32.mrb[0].mxu0
      %450 = vmatprep.mubr.bf16.mxu0 0
      %451 = vmatmul.mubr.bf16.gmra.mrb[0].mxu0 %v317
      %v452 = vpop.f32.mrb[0].mxu0
      %v453 = vadd.f32 0.0, %v452
      %v454 = vpop.f32.mrb[0].mxu0
      %v455 = vpop.f32.mrb[0].mxu0
      %v456 = vadd.f32 0.0, %v455
      %v457 = vpop.f32.mrb[0].mxu0
      %458 = vmatprep.mubr.bf16.mxu0 0
      %459 = vmatmul.mubr.bf16.gmra.mrb[0].mxu0 %v318
      %v460 = vpop.f32.mrb[0].mxu0
      %v461 = vadd.f32 0.0, %v460
      %v462 = vpop.f32.mrb[0].mxu0
      %v463 = vpop.f32.mrb[0].mxu0
      %v464 = vadd.f32 0.0, %v463
      %v465 = vpop.f32.mrb[0].mxu0
      %466 = vmatprep.mubr.bf16.mxu0 0
      %467 = vmatmul.mubr.bf16.gmra.mrb[0].mxu0 %v319
      %v468 = vpop.f32.mrb[0].mxu0
      %v469 = vadd.f32 0.0, %v468
      %v470 = vpop.f32.mrb[0].mxu0
      %v471 = vpop.f32.mrb[0].mxu0
      %v472 = vadd.f32 0.0, %v471
      %v473 = vpop.f32.mrb[0].mxu0
      %474 = vmatprep.mubr.bf16.mxu0 0
      %475 = vmatmul.mubr.bf16.gmra.mrb[0].mxu0 %v320
      %v476 = vpop.f32.mrb[0].mxu0
      %v477 = vadd.f32 0.0, %v476
      %v478 = vpop.f32.mrb[0].mxu0
      %v479 = vpop.f32.mrb[0].mxu0
      %v480 = vadd.f32 0.0, %v479
      %v481 = vpop.f32.mrb[0].mxu0
      %482 = vmatprep.mubr.bf16.mxu0 0
      %483 = vmatmul.mubr.bf16.gmra.mrb[0].mxu0 %v321
      %v484 = vpop.f32.mrb[0].mxu0
      %v485 = vadd.f32 0.0, %v484
      %v486 = vpop.f32.mrb[0].mxu0
      %v487 = vpop.f32.mrb[0].mxu0
      %v488 = vadd.f32 0.0, %v487
      %v489 = vpop.f32.mrb[0].mxu0
      %490 = vmatprep.mubr.bf16.mxu0 0
      %491 = vmatmul.mubr.bf16.gmra.mrb[0].mxu0 %v322
      %v492 = vpop.f32.mrb[0].mxu0
      %v493 = vadd.f32 0.0, %v492
      %v494 = vpop.f32.mrb[0].mxu0
      %v495 = vpop.f32.mrb[0].mxu0
      %v496 = vadd.f32 0.0, %v495
      %v497 = vpop.f32.mrb[0].mxu0
      %498 = vmatprep.mubr.bf16.mxu0 0
      %499 = vmatmul.mubr.bf16.gmra.mrb[0].mxu0 %v323
      %v500 = vpop.f32.mrb[0].mxu0
      %v501 = vadd.f32 0.0, %v500
      %v502 = vpop.f32.mrb[0].mxu0
      %v503 = vpop.f32.mrb[0].mxu0
      %v504 = vadd.f32 0.0, %v503
      %v505 = vpop.f32.mrb[0].mxu0
      %506 = vmatprep.mubr.bf16.mxu0 0
      %507 = vmatmul.mubr.bf16.gmra.mrb[0].mxu0 %v324
      %v508 = vpop.f32.mrb[0].mxu0
      %v509 = vadd.f32 0.0, %v508
      %v510 = vpop.f32.mrb[0].mxu0
      %v511 = vpop.f32.mrb[0].mxu0
      %v512 = vadd.f32 0.0, %v511
      %v513 = vpop.f32.mrb[0].mxu0
      %514 = vmatprep.mubr.bf16.mxu0 0
      %515 = vmatmul.mubr.bf16.gmra.mrb[0].mxu0 %v325
      %v516 = vpop.f32.mrb[0].mxu0
      %v517 = vadd.f32 0.0, %v516
      %v518 = vpop.f32.mrb[0].mxu0
      %v519 = vpop.f32.mrb[0].mxu0
      %v520 = vadd.f32 0.0, %v519
      %v521 = vpop.f32.mrb[0].mxu0
      %522 = vmatprep.mubr.bf16.mxu0 0
      %523 = vmatmul.mubr.bf16.gmra.mrb[0].mxu0 %v326
      %v524 = vpop.f32.mrb[0].mxu0
      %v525 = vadd.f32 0.0, %v524
      %v526 = vpop.f32.mrb[0].mxu0
      %v527 = vpop.f32.mrb[0].mxu0
      %v528 = vadd.f32 0.0, %v527
      %v529 = vpop.f32.mrb[0].mxu0
      %530 = vmatprep.mubr.bf16.mxu0 0
      %531 = vmatmul.mubr.bf16.gmra.mrb[0].mxu0 %v327
      %v532 = vpop.f32.mrb[0].mxu0
      %v533 = vadd.f32 0.0, %v532
      %v534 = vpop.f32.mrb[0].mxu0
      %v535 = vpop.f32.mrb[0].mxu0
      %v536 = vadd.f32 0.0, %v535
      %v537 = vpop.f32.mrb[0].mxu0
      %538 = vmatprep.mubr.bf16.mxu0 0
      %539 = vmatmul.mubr.bf16.gmra.mrb[0].mxu0 %v328
      %v540 = vpop.f32.mrb[0].mxu0
      %v541 = vadd.f32 0.0, %v540
      %v542 = vpop.f32.mrb[0].mxu0
      %v543 = vpop.f32.mrb[0].mxu0
      %v544 = vadd.f32 0.0, %v543
      %v545 = vpop.f32.mrb[0].mxu0
      %546 = vmatprep.mubr.bf16.mxu0 0
      %547 = vmatmul.mubr.bf16.gmra.mrb[0].mxu0 %v329
      %v548 = vpop.f32.mrb[0].mxu0
      %v549 = vadd.f32 0.0, %v548
      %v550 = vpop.f32.mrb[0].mxu0
      %v551 = vpop.f32.mrb[0].mxu0
      %v552 = vadd.f32 0.0, %v551
      %v553 = vpop.f32.mrb[0].mxu0
      %554 = vdwg.mxu0
      %v555 = vld [vmem:[%s2] sm:$0x1]
      %v557 = vlaneseq
      %v558 = vshrl.u32 %v557, 7
      %v559 = vsub.s32 0, %v558
      %v560 = vrot.slane %v555, %v559
      %v562 = vmul.f32 %v429, %v560
      %v563 = vmul.f32 %v432, %v560
      %v564 = vmul.f32 %v437, %v560
      %v565 = vmul.f32 %v440, %v560
      %v566 = vmul.f32 %v445, %v560
      %v567 = vmul.f32 %v448, %v560
      %v568 = vmul.f32 %v453, %v560
      %v569 = vmul.f32 %v456, %v560
      %v570 = vmul.f32 %v461, %v560
      %v571 = vmul.f32 %v464, %v560
      %v572 = vmul.f32 %v469, %v560
      %v573 = vmul.f32 %v472, %v560
      %v574 = vmul.f32 %v477, %v560
      %v575 = vmul.f32 %v480, %v560
      %v576 = vmul.f32 %v485, %v560
      %v577 = vmul.f32 %v488, %v560
      %v578 = vmul.f32 %v493, %v560
      %v579 = vmul.f32 %v496, %v560
      %v580 = vmul.f32 %v501, %v560
      %v581 = vmul.f32 %v504, %v560
      %v582 = vmul.f32 %v509, %v560
      %v583 = vmul.f32 %v512, %v560
      %v584 = vmul.f32 %v517, %v560
      %v585 = vmul.f32 %v520, %v560
      %v586 = vmul.f32 %v525, %v560
      %v587 = vmul.f32 %v528, %v560
      %v588 = vmul.f32 %v533, %v560
      %v589 = vmul.f32 %v536, %v560
      %v590 = vmul.f32 %v541, %v560
      %v591 = vmul.f32 %v544, %v560
      %v592 = vmul.f32 %v549, %v560
      %v593 = vmul.f32 %v552, %v560
      %v594 = vld [vmem:[%s3] sm:$0x1]
      %v596 = vlaneseq
      %v597 = vshrl.u32 %v596, 7
      %v598 = vsub.s32 0, %v597
      %v599 = vrot.slane %v594, %v598
      %v601 = vadd.f32 %v562, %v599
      %v602 = vadd.f32 %v563, %v599
      %v603 = vadd.f32 %v564, %v599
      %v604 = vadd.f32 %v565, %v599
      %v605 = vadd.f32 %v566, %v599
      %v606 = vadd.f32 %v567, %v599
      %v607 = vadd.f32 %v568, %v599
      %v608 = vadd.f32 %v569, %v599
      %v609 = vadd.f32 %v570, %v599
      %v610 = vadd.f32 %v571, %v599
      %v611 = vadd.f32 %v572, %v599
      %v612 = vadd.f32 %v573, %v599
      %v613 = vadd.f32 %v574, %v599
      %v614 = vadd.f32 %v575, %v599
      %v615 = vadd.f32 %v576, %v599
      %v616 = vadd.f32 %v577, %v599
      %v617 = vadd.f32 %v578, %v599
      %v618 = vadd.f32 %v579, %v599
      %v619 = vadd.f32 %v580, %v599
      %v620 = vadd.f32 %v581, %v599
      %v621 = vadd.f32 %v582, %v599
      %v622 = vadd.f32 %v583, %v599
      %v623 = vadd.f32 %v584, %v599
      %v624 = vadd.f32 %v585, %v599
      %v625 = vadd.f32 %v586, %v599
      %v626 = vadd.f32 %v587, %v599
      %v627 = vadd.f32 %v588, %v599
      %v628 = vadd.f32 %v589, %v599
      %v629 = vadd.f32 %v590, %v599
      %v630 = vadd.f32 %v591, %v599
      %v631 = vadd.f32 %v592, %v599
      %v632 = vadd.f32 %v593, %v599
      %v633 = vmax.f32 %v601, 0.0
      %v634 = vmax.f32 %v602, 0.0
      %v635 = vmax.f32 %v603, 0.0
      %v636 = vmax.f32 %v604, 0.0
      %v637 = vmax.f32 %v605, 0.0
      %v638 = vmax.f32 %v606, 0.0
      %v639 = vmax.f32 %v607, 0.0
      %v640 = vmax.f32 %v608, 0.0
      %v641 = vmax.f32 %v609, 0.0
      %v642 = vmax.f32 %v610, 0.0
      %v643 = vmax.f32 %v611, 0.0
      %v644 = vmax.f32 %v612, 0.0
      %v645 = vmax.f32 %v613, 0.0
      %v646 = vmax.f32 %v614, 0.0
      %v647 = vmax.f32 %v615, 0.0
      %v648 = vmax.f32 %v616, 0.0
      %v649 = vmax.f32 %v617, 0.0
      %v650 = vmax.f32 %v618, 0.0
      %v651 = vmax.f32 %v619, 0.0
      %v652 = vmax.f32 %v620, 0.0
      %v653 = vmax.f32 %v621, 0.0
      %v654 = vmax.f32 %v622, 0.0
      %v655 = vmax.f32 %v623, 0.0
      %v656 = vmax.f32 %v624, 0.0
      %v657 = vmax.f32 %v625, 0.0
      %v658 = vmax.f32 %v626, 0.0
      %v659 = vmax.f32 %v627, 0.0
      %v660 = vmax.f32 %v628, 0.0
      %v661 = vmax.f32 %v629, 0.0
      %v662 = vmax.f32 %v630, 0.0
      %v663 = vmax.f32 %v631, 0.0
      %v664 = vmax.f32 %v632, 0.0
      %665 = vst [vmem:[%s199] sm:$0xff] %v633
      %666 = vst [vmem:[%s199 + $0x8] sm:$0xff] %v634
      %667 = vst [vmem:[%s199 + $0x10] sm:$0xff] %v635
      %668 = vst [vmem:[%s199 + $0x18] sm:$0xff] %v636
      %669 = vst [vmem:[%s199 + $0x20] sm:$0xff] %v637
      %670 = vst [vmem:[%s199 + $0x28] sm:$0xff] %v638
      %671 = vst [vmem:[%s199 + $0x30] sm:$0xff] %v639
      %672 = vst [vmem:[%s199 + $0x38] sm:$0xff] %v640
      %673 = vst [vmem:[%s199 + $0x40] sm:$0xff] %v641
      %674 = vst [vmem:[%s199 + $0x48] sm:$0xff] %v642
      %675 = vst [vmem:[%s199 + $0x50] sm:$0xff] %v643
      %676 = vst [vmem:[%s199 + $0x58] sm:$0xff] %v644
      %677 = vst [vmem:[%s199 + $0x60] sm:$0xff] %v645
      %678 = vst [vmem:[%s199 + $0x68] sm:$0xff] %v646
      %679 = vst [vmem:[%s199 + $0x70] sm:$0xff] %v647
      %680 = vst [vmem:[%s199 + $0x78] sm:$0xff] %v648
      %681 = vst [vmem:[%s199 + $0x80] sm:$0xff] %v649
      %682 = vst [vmem:[%s199 + $0x88] sm:$0xff] %v650
      %683 = vst [vmem:[%s199 + $0x90] sm:$0xff] %v651
      %684 = vst [vmem:[%s199 + $0x98] sm:$0xff] %v652
      %685 = vst [vmem:[%s199 + $0xa0] sm:$0xff] %v653
      %686 = vst [vmem:[%s199 + $0xa8] sm:$0xff] %v654
      %687 = vst [vmem:[%s199 + $0xb0] sm:$0xff] %v655
      %688 = vst [vmem:[%s199 + $0xb8] sm:$0xff] %v656
      %689 = vst [vmem:[%s199 + $0xc0] sm:$0xff] %v657
      %690 = vst [vmem:[%s199 + $0xc8] sm:$0xff] %v658
      %691 = vst [vmem:[%s199 + $0xd0] sm:$0xff] %v659
      %692 = vst [vmem:[%s199 + $0xd8] sm:$0xff] %v660
      %693 = vst [vmem:[%s199 + $0xe0] sm:$0xff] %v661
      %694 = vst [vmem:[%s199 + $0xe8] sm:$0xff] %v662
      %695 = vst [vmem:[%s199 + $0xf0] sm:$0xff] %v663
      %696 = vst [vmem:[%s199 + $0xf8] sm:$0xff] %v664
      %s697 = smul.u32 32, %s15
      %p698 = scmp.lt.s32.totalorder %s697, 63
      %s699 = scalar_select %p698, %s697, 63
      %s700 = smul.addr %s699, 8
      %s701 = scalar_lea.vmem %s4, %s700
      // Predicated region
      $region37: #{conv_bn_relu.3} parent=35 // pred_check
        %p702 = pneg %p122
      $region38: #{conv_bn_relu.3} parent=35 // pred_check_branch
        %704 = sbr.rel (%p702) target = $region40
      $region39: #{conv_bn_relu.3} parent=35 // pred_region
        %s705 = smul.u32 32, %s15
      $region40: #{conv_bn_relu.3} parent=35 // pred_fallthru
        _
    $region36: #{conv_bn_relu.3} parent=5 // pred_fallthru
      _
    %p706 = scmp.le.s32.totalorder 2, %s10
    // Predicated region
    $region41: #{conv_bn_relu.3} parent=5 // pred_check
      %p707 = pneg %p706
    $region42: #{conv_bn_relu.3} parent=5 // pred_check_branch
      %709 = sbr.rel (%p707) target = $region44
    $region43: #{conv_bn_relu.3} parent=5 // pred_region
      %s710 = ssub.s32 %s10, 2
      // Predicated region
      $region45: #{conv_bn_relu.3} parent=43 // pred_check
        %p711 = pneg %p128
      $region46: #{conv_bn_relu.3} parent=43 // pred_check_branch
        %713 = sbr.rel (%p711) target = $region48
      $region47: #{conv_bn_relu.3} parent=43 // pred_region
        %s714 = smul.u32 32, %s16
        %p715 = scmp.lt.s32.totalorder %s714, 63
        %s716 = scalar_select %p715, %s714, 63
        %s717 = smul.addr %s716, 8
        %s718 = scalar_lea.vmem %s4, %s717
      $region48: #{conv_bn_relu.3} parent=43 // pred_fallthru
        _
    $region44: #{conv_bn_relu.3} parent=5 // pred_fallthru
      _
  $region6: #{conv_bn_relu.3} parent=0 // loop_footer
    %s14 = sadd.s32 1, %s10
  $region7: #{conv_bn_relu.3} parent=0 // loop_footer_branch
    %9 = sbr.rel target = $region3
  $region8: #{conv_bn_relu.3} parent=0 // loop_exit
    _

// kernel: conv_bn_relu.2
$region0: #{conv_bn_relu.2}
  #allocation0 [shape = 'u32[]', space=smem, size = 0x4, offset = 0x4, fixed_abs, tag = 'smem constant byte address 0x4 - core index']
  #allocation1 [shape = 'u32[144,128]{1,0:T(1,128)}', space=vmem, size = 0x12000, scoped, tag = 'internal scratch']
  #allocation2 [shape = 'f32[1,128]{1,0:T(1,128)}', space=vmem, size = 0x200, scoped, tag = 'scratch operand']
  #allocation3 [shape = 'f32[1,128]{1,0:T(1,128)}', space=vmem, size = 0x200, scoped, tag = 'scratch operand']
  %s0 = inlined_call_operand.vmem [shape: bf16[512,128], index: 0, kind: input, shape index: {}]
  %s1 = inlined_call_operand.vmem [shape: bf16[128,128], index: 1, kind: input, shape index: {}]
  %s2 = inlined_call_operand.vmem [shape: f32[1,128], index: 2, kind: input, shape index: {}]
  %s3 = inlined_call_operand.vmem [shape: f32[1,128], index: 3, kind: input, shape index: {}]
  %s4 = inlined_call_operand.vmem [shape: f32[1,128], index: 4, kind: output, shape index: {0}]
  %s5 = inlined_call_operand.vmem [shape: f32[1,128], index: 5, kind: output, shape index: {1}]
  %6 = xla_tuple %s4, %s5
  %s7 = sld [smem:[#allocation0]]
  $region65: #{conv_bn_relu.2} parent=0
    _
  %s9 = ssub.s32 1, %s7
  %s10 = scalar_select 0, %s9, %s7
  loop: start=0, step=1, limit=4
  $region2: #{conv_bn_relu.2} parent=0 // loop_pre_header
    _
  $region3: #{conv_bn_relu.2} parent=0 // loop_header
    %s12 = sphi 0, %s16
    %p13 = scmp.ge.s32.totalorder %s12, 4
    %s22 = sphi 0, %s24
    %s25 = sphi 0, %s22
    %s26 = sphi 0, %s25
    %s42 = sphi 0, %s26
    %s46 = sphi 0, %s46
    %s48 = sphi 0, %s46
    %s49 = sphi 0, %s48
    %s63 = sphi 0, %s49
    %s67 = sphi 0, %s67
    %s69 = sphi 0, %s67
    %s70 = sphi 0, %s69
    %s84 = sphi 0, %s70
    %s88 = sphi 0, %s88
    %s90 = sphi 0, %s88
    %s91 = sphi 0, %s90
    %s105 = sphi 0, %s91
    %s109 = sphi 0, %s109
    %s111 = sphi 0, %s109
    %s112 = sphi 0, %s111
    %s126 = sphi 0, %s112
    %s130 = sphi 0, %s130
    %s132 = sphi 0, %s130
    %s133 = sphi 0, %s132
    %s147 = sphi 0, %s133
  $region4: #{conv_bn_relu.2} parent=0 // loop_header_branch
    %15 = sbr.rel (%p13) target = $region8
  $region5: #{conv_bn_relu.2} parent=0 // loop_body
    %s17 = ssub.s32 %s12, 1
    %s18 = ssub.s32 %s12, 2
    %s19 = sadd.s32 %s12, 1
    %s20 = ssub.s32 %s12, %s19
    %p21 = scmp.eq.s32.totalorder %s20, 0
    %s23 = sadd.s32 %s22, 1
    %s24 = scalar_select %p21, %s22, %s23
    %p27 = pneg %p21
    %p28 = scmp.eq.s32.totalorder %s12, 1
    %p29 = por %p27, %p28
    %p30 = scmp.ne.s32.totalorder %s22, %s25
    %p31 = scmp.eq.s32.totalorder %s12, 0
    %p32 = por %p30, %p31
    %p33 = scmp.ne.s32.totalorder %s22, %s25
    %p34 = scmp.eq.s32.totalorder %s17, 1
    %p35 = por %p33, %p34
    %p36 = scmp.ne.s32.totalorder %s25, %s26
    %p37 = scmp.eq.s32.totalorder %s17, 0
    %p38 = por %p36, %p37
    %p39 = scmp.ne.s32.totalorder %s25, %s26
    %p40 = scmp.eq.s32.totalorder %s18, 1
    %p41 = por %p39, %p40
    %p43 = scmp.ne.s32.totalorder %s26, %s42
    %p44 = scmp.eq.s32.totalorder %s18, 0
    %p45 = por %p43, %p44
    %s47 = sadd.s32 %s46, 1
    %p50 = scmp.eq.s32.totalorder %s12, 1
    %p51 = scmp.ne.s32.totalorder %s46, %s48
    %p52 = scmp.eq.s32.totalorder %s12, 0
    %p53 = por %p51, %p52
    %p54 = scmp.ne.s32.totalorder %s46, %s48
    %p55 = scmp.eq.s32.totalorder %s17, 1
    %p56 = por %p54, %p55
    %p57 = scmp.ne.s32.totalorder %s48, %s49
    %p58 = scmp.eq.s32.totalorder %s17, 0
    %p59 = por %p57, %p58
    %p60 = scmp.ne.s32.totalorder %s48, %s49
    %p61 = scmp.eq.s32.totalorder %s18, 1
    %p62 = por %p60, %p61
    %p64 = scmp.ne.s32.totalorder %s49, %s63
    %p65 = scmp.eq.s32.totalorder %s18, 0
    %p66 = por %p64, %p65
    %s68 = sadd.s32 %s67, 1
    %p71 = scmp.eq.s32.totalorder %s12, 1
    %p72 = scmp.ne.s32.totalorder %s67, %s69
    %p73 = scmp.eq.s32.totalorder %s12, 0
    %p74 = por %p72, %p73
    %p75 = scmp.ne.s32.totalorder %s67, %s69
    %p76 = scmp.eq.s32.totalorder %s17, 1
    %p77 = por %p75, %p76
    %p78 = scmp.ne.s32.totalorder %s69, %s70
    %p79 = scmp.eq.s32.totalorder %s17, 0
    %p80 = por %p78, %p79
    %p81 = scmp.ne.s32.totalorder %s69, %s70
    %p82 = scmp.eq.s32.totalorder %s18, 1
    %p83 = por %p81, %p82
    %p85 = scmp.ne.s32.totalorder %s70, %s84
    %p86 = scmp.eq.s32.totalorder %s18, 0
    %p87 = por %p85, %p86
    %s89 = sadd.s32 %s88, 1
    %p92 = scmp.eq.s32.totalorder %s12, 1
    %p93 = scmp.ne.s32.totalorder %s88, %s90
    %p94 = scmp.eq.s32.totalorder %s12, 0
    %p95 = por %p93, %p94
    %p96 = scmp.ne.s32.totalorder %s88, %s90
    %p97 = scmp.eq.s32.totalorder %s17, 1
    %p98 = por %p96, %p97
    %p99 = scmp.ne.s32.totalorder %s90, %s91
    %p100 = scmp.eq.s32.totalorder %s17, 0
    %p101 = por %p99, %p100
    %p102 = scmp.ne.s32.totalorder %s90, %s91
    %p103 = scmp.eq.s32.totalorder %s18, 1
    %p104 = por %p102, %p103
    %p106 = scmp.ne.s32.totalorder %s91, %s105
    %p107 = scmp.eq.s32.totalorder %s18, 0
    %p108 = por %p106, %p107
    %s110 = sadd.s32 %s109, 1
    %p113 = scmp.eq.s32.totalorder %s12, 1
    %p114 = scmp.ne.s32.totalorder %s109, %s111
    %p115 = scmp.eq.s32.totalorder %s12, 0
    %p116 = por %p114, %p115
    %p117 = scmp.ne.s32.totalorder %s109, %s111
    %p118 = scmp.eq.s32.totalorder %s17, 1
    %p119 = por %p117, %p118
    %p120 = scmp.ne.s32.totalorder %s111, %s112
    %p121 = scmp.eq.s32.totalorder %s17, 0
    %p122 = por %p120, %p121
    %p123 = scmp.ne.s32.totalorder %s111, %s112
    %p124 = scmp.eq.s32.totalorder %s18, 1
    %p125 = por %p123, %p124
    %p127 = scmp.ne.s32.totalorder %s112, %s126
    %p128 = scmp.eq.s32.totalorder %s18, 0
    %p129 = por %p127, %p128
    %s131 = sadd.s32 %s130, 1
    %p134 = scmp.eq.s32.totalorder %s12, 1
    %p135 = scmp.ne.s32.totalorder %s130, %s132
    %p136 = scmp.eq.s32.totalorder %s12, 0
    %p137 = por %p135, %p136
    %p138 = scmp.ne.s32.totalorder %s130, %s132
    %p139 = scmp.eq.s32.totalorder %s17, 1
    %p140 = por %p138, %p139
    %p141 = scmp.ne.s32.totalorder %s132, %s133
    %p142 = scmp.eq.s32.totalorder %s17, 0
    %p143 = por %p141, %p142
    %p144 = scmp.ne.s32.totalorder %s132, %s133
    %p145 = scmp.eq.s32.totalorder %s18, 1
    %p146 = por %p144, %p145
    %p148 = scmp.ne.s32.totalorder %s133, %s147
    %p149 = scmp.eq.s32.totalorder %s18, 0
    %p150 = por %p148, %p149
    %p151 = scmp.le.s32.totalorder 1, %s12
    %p152 = scmp.lt.s32.totalorder %s12, 3
    %p153 = pnand %p151, %p152
    %p154 = pneg %p153
    // Predicated region
    $region9: #{conv_bn_relu.2} parent=5 // pred_check
      _
    $region10: #{conv_bn_relu.2} parent=5 // pred_check_branch
      %156 = sbr.rel (%p153) target = $region12
    $region11: #{conv_bn_relu.2} parent=5 // pred_region
      %s157 = ssub.s32 %s12, 1
      // Predicated region
      $region13: #{conv_bn_relu.2} parent=11 // pred_check
        %p158 = pneg %p59
      $region14: #{conv_bn_relu.2} parent=11 // pred_check_branch
        %160 = sbr.rel (%p158) target = $region16
      $region15: #{conv_bn_relu.2} parent=11 // pred_region
        _
      $region16: #{conv_bn_relu.2} parent=11 // pred_fallthru
        _
      // Predicated region
      $region17: #{conv_bn_relu.2} parent=11 // pred_check
        %p161 = pneg %p80
      $region18: #{conv_bn_relu.2} parent=11 // pred_check_branch
        %163 = sbr.rel (%p161) target = $region20
      $region19: #{conv_bn_relu.2} parent=11 // pred_region
        _
      $region20: #{conv_bn_relu.2} parent=11 // pred_fallthru
        _
      // Predicated region
      $region21: #{conv_bn_relu.2} parent=11 // pred_check
        %p164 = pneg %p101
      $region22: #{conv_bn_relu.2} parent=11 // pred_check_branch
        %166 = sbr.rel (%p164) target = $region24
      $region23: #{conv_bn_relu.2} parent=11 // pred_region
        _
      $region24: #{conv_bn_relu.2} parent=11 // pred_fallthru
        _
    $region12: #{conv_bn_relu.2} parent=5 // pred_fallthru
      _
    %p167 = scmp.lt.s32.totalorder %s12, 2
    // Predicated region
    $region25: #{conv_bn_relu.2} parent=5 // pred_check
      %p168 = pneg %p167
    $region26: #{conv_bn_relu.2} parent=5 // pred_check_branch
      %170 = sbr.rel (%p168) target = $region28
    $region27: #{conv_bn_relu.2} parent=5 // pred_region
      // Predicated region
      $region29: #{conv_bn_relu.2} parent=27 // pred_check
        %p171 = pneg %p32
      $region30: #{conv_bn_relu.2} parent=27 // pred_check_branch
        %173 = sbr.rel (%p171) target = $region32
      $region31: #{conv_bn_relu.2} parent=27 // pred_region
        %s174 = smul.u32 32, %s12
        %p175 = scmp.lt.s32.totalorder %s174, 63
        %s176 = scalar_select %p175, %s174, 63
        %s177 = smul.addr %s176, 4
        %s178 = scalar_lea.vmem %s0, %s177
        %s179 = smul.u32 32, %s12
      $region32: #{conv_bn_relu.2} parent=27 // pred_fallthru
        _
    $region28: #{conv_bn_relu.2} parent=5 // pred_fallthru
      _
    %p180 = scmp.le.s32.totalorder 1, %s12
    %p181 = scmp.lt.s32.totalorder %s12, 3
    %p182 = pnand %p180, %p181
    %p183 = pneg %p182
    // Predicated region
    $region33: #{conv_bn_relu.2} parent=5 // pred_check
      _
    $region34: #{conv_bn_relu.2} parent=5 // pred_check_branch
      %185 = sbr.rel (%p182) target = $region36
    $region35: #{conv_bn_relu.2} parent=5 // pred_region
      %s186 = ssub.s32 %s12, 1
      %s187 = smul.u32 32, %s17
      %p188 = scmp.lt.s32.totalorder %s187, 63
      %s189 = scalar_select %p188, %s187, 63
      %s190 = smul.addr %s189, 4
      %s191 = scalar_lea.vmem %s0, %s190
      %p192 = pneg %p38
      %p193 = pneg %p35
      %p194 = pneg %p59
      %p195 = pneg %p56
      %p196 = pneg %p80
      %p197 = pneg %p77
      %p198 = pneg %p101
      %p199 = pneg %p98
      %p200 = pneg %p122
      %p201 = pneg %p119
      %p202 = pneg %p143
      %p203 = pneg %p140
      %s204 = smul.u32 32, %s17
      %p205 = scmp.lt.s32.totalorder %s204, 63
      %s206 = scalar_select %p205, %s204, 63
      %s207 = smul.addr %s206, 4
      %s208 = scalar_lea.vmem %s0, %s207
      %s209 = smul.u32 32, %s17
      %p211 = scmp.eq.s32.totalorder %s17, 0
      // Predicated region
      $region37: #{conv_bn_relu.2} parent=35 // pred_check
        %p212 = pneg %p211
      $region38: #{conv_bn_relu.2} parent=35 // pred_check_branch
        %214 = sbr.rel (%p212) target = $region40
      $region39: #{conv_bn_relu.2} parent=35 // pred_region
        %215 = vst [vmem:[#allocation2] sm:$0x1] 0.0
        %216 = vst [vmem:[#allocation3] sm:$0x1] 0.0
      $region40: #{conv_bn_relu.2} parent=35 // pred_fallthru
        _
      %v217 = vld [vmem:[%s208] sm:$0xf]
      %v218 = vld [vmem:[%s208 + $0x4] sm:$0xf]
      %v219 = vld [vmem:[%s208 + $0x8] sm:$0xf]
      %v220 = vld [vmem:[%s208 + $0xc] sm:$0xf]
      %v221 = vld [vmem:[%s208 + $0x10] sm:$0xf]
      %v222 = vld [vmem:[%s208 + $0x14] sm:$0xf]
      %v223 = vld [vmem:[%s208 + $0x18] sm:$0xf]
      %v224 = vld [vmem:[%s208 + $0x1c] sm:$0xf]
      %v225 = vld [vmem:[%s208 + $0x20] sm:$0xf]
      %v226 = vld [vmem:[%s208 + $0x24] sm:$0xf]
      %v227 = vld [vmem:[%s208 + $0x28] sm:$0xf]
      %v228 = vld [vmem:[%s208 + $0x2c] sm:$0xf]
      %v229 = vld [vmem:[%s208 + $0x30] sm:$0xf]
      %v230 = vld [vmem:[%s208 + $0x34] sm:$0xf]
      %v231 = vld [vmem:[%s208 + $0x38] sm:$0xf]
      %v232 = vld [vmem:[%s208 + $0x3c] sm:$0xf]
      %v233 = vld [vmem:[%s208 + $0x40] sm:$0xf]
      %v234 = vld [vmem:[%s208 + $0x44] sm:$0xf]
      %v235 = vld [vmem:[%s208 + $0x48] sm:$0xf]
      %v236 = vld [vmem:[%s208 + $0x4c] sm:$0xf]
      %v237 = vld [vmem:[%s208 + $0x50] sm:$0xf]
      %v238 = vld [vmem:[%s208 + $0x54] sm:$0xf]
      %v239 = vld [vmem:[%s208 + $0x58] sm:$0xf]
      %v240 = vld [vmem:[%s208 + $0x5c] sm:$0xf]
      %v241 = vld [vmem:[%s208 + $0x60] sm:$0xf]
      %v242 = vld [vmem:[%s208 + $0x64] sm:$0xf]
      %v243 = vld [vmem:[%s208 + $0x68] sm:$0xf]
      %v244 = vld [vmem:[%s208 + $0x6c] sm:$0xf]
      %v245 = vld [vmem:[%s208 + $0x70] sm:$0xf]
      %v246 = vld [vmem:[%s208 + $0x74] sm:$0xf]
      %v247 = vld [vmem:[%s208 + $0x78] sm:$0xf]
      %v248 = vld [vmem:[%s208 + $0x7c] sm:$0xf]
      %v249 = vld [vmem:[%s1] sm:$0xf]
      %v250 = vld [vmem:[%s1 + $0x4] sm:$0xf]
      %v251 = vld [vmem:[%s1 + $0x8] sm:$0xf]
      %v252 = vld [vmem:[%s1 + $0xc] sm:$0xf]
      %v253 = vld [vmem:[%s1 + $0x10] sm:$0xf]
      %v254 = vld [vmem:[%s1 + $0x14] sm:$0xf]
      %v255 = vld [vmem:[%s1 + $0x18] sm:$0xf]
      %v256 = vld [vmem:[%s1 + $0x1c] sm:$0xf]
      %v257 = vld [vmem:[%s1 + $0x20] sm:$0xf]
      %v258 = vld [vmem:[%s1 + $0x24] sm:$0xf]
      %v259 = vld [vmem:[%s1 + $0x28] sm:$0xf]
      %v260 = vld [vmem:[%s1 + $0x2c] sm:$0xf]
      %v261 = vld [vmem:[%s1 + $0x30] sm:$0xf]
      %v262 = vld [vmem:[%s1 + $0x34] sm:$0xf]
      %v263 = vld [vmem:[%s1 + $0x38] sm:$0xf]
      %v264 = vld [vmem:[%s1 + $0x3c] sm:$0xf]
      %v297 = vunpack.c.l.b16 %v217
      %v298 = vunpack.c.l.b16 %v218
      %v299 = vunpack.c.l.b16 %v219
      %v300 = vunpack.c.l.b16 %v220
      %v301 = vunpack.c.l.b16 %v221
      %v302 = vunpack.c.l.b16 %v222
      %v303 = vunpack.c.l.b16 %v223
      %v304 = vunpack.c.l.b16 %v224
      %v305 = vunpack.c.l.b16 %v225
      %v306 = vunpack.c.l.b16 %v226
      %v307 = vunpack.c.l.b16 %v227
      %v308 = vunpack.c.l.b16 %v228
      %v309 = vunpack.c.l.b16 %v229
      %v310 = vunpack.c.l.b16 %v230
      %v311 = vunpack.c.l.b16 %v231
      %v312 = vunpack.c.l.b16 %v232
      %v313 = vunpack.c.l.b16 %v233
      %v314 = vunpack.c.l.b16 %v234
      %v315 = vunpack.c.l.b16 %v235
      %v316 = vunpack.c.l.b16 %v236
      %v317 = vunpack.c.l.b16 %v237
      %v318 = vunpack.c.l.b16 %v238
      %v319 = vunpack.c.l.b16 %v239
      %v320 = vunpack.c.l.b16 %v240
      %v321 = vunpack.c.l.b16 %v241
      %v322 = vunpack.c.l.b16 %v242
      %v323 = vunpack.c.l.b16 %v243
      %v324 = vunpack.c.l.b16 %v244
      %v325 = vunpack.c.l.b16 %v245
      %v326 = vunpack.c.l.b16 %v246
      %v327 = vunpack.c.l.b16 %v247
      %v328 = vunpack.c.l.b16 %v248
      %v329 = vpack.c.b16 %v298, %v297
      %v330 = vpack.c.b16 %v300, %v299
      %v331 = vpack.c.b16 %v302, %v301
      %v332 = vpack.c.b16 %v304, %v303
      %v333 = vpack.c.b16 %v306, %v305
      %v334 = vpack.c.b16 %v308, %v307
      %v335 = vpack.c.b16 %v310, %v309
      %v336 = vpack.c.b16 %v312, %v311
      %v337 = vpack.c.b16 %v314, %v313
      %v338 = vpack.c.b16 %v316, %v315
      %v339 = vpack.c.b16 %v318, %v317
      %v340 = vpack.c.b16 %v320, %v319
      %v341 = vpack.c.b16 %v322, %v321
      %v342 = vpack.c.b16 %v324, %v323
      %v343 = vpack.c.b16 %v326, %v325
      %v344 = vpack.c.b16 %v328, %v327
      %v377 = vunpack.c.l.b16 %v249
      %v378 = vunpack.c.l.b16 %v250
      %v379 = vunpack.c.l.b16 %v251
      %v380 = vunpack.c.l.b16 %v252
      %v381 = vunpack.c.l.b16 %v253
      %v382 = vunpack.c.l.b16 %v254
      %v383 = vunpack.c.l.b16 %v255
      %v384 = vunpack.c.l.b16 %v256
      %v385 = vunpack.c.l.b16 %v257
      %v386 = vunpack.c.l.b16 %v258
      %v387 = vunpack.c.l.b16 %v259
      %v388 = vunpack.c.l.b16 %v260
      %v389 = vunpack.c.l.b16 %v261
      %v390 = vunpack.c.l.b16 %v262
      %v391 = vunpack.c.l.b16 %v263
      %v392 = vunpack.c.l.b16 %v264
      %v393 = vpack.c.b16 %v378, %v377
      %v394 = vpack.c.b16 %v380, %v379
      %v395 = vpack.c.b16 %v382, %v381
      %v396 = vpack.c.b16 %v384, %v383
      %v397 = vpack.c.b16 %v386, %v385
      %v398 = vpack.c.b16 %v388, %v387
      %v399 = vpack.c.b16 %v390, %v389
      %v400 = vpack.c.b16 %v392, %v391
      %409 = vmatprep.subr.bf16.mxu0 0
      %410 = vmatpush1.bf16.msra.mxu0 %v393
      %411 = vmatprep.subr.bf16.mxu0 0
      %412 = vmatpush1.bf16.msra.mxu0 %v394
      %413 = vmatprep.subr.bf16.mxu0 0
      %414 = vmatpush1.bf16.msra.mxu0 %v395
      %415 = vmatprep.subr.bf16.mxu0 0
      %416 = vmatpush1.bf16.msra.mxu0 %v396
      %417 = vmatprep.subr.bf16.mxu0 0
      %418 = vmatpush1.bf16.msra.mxu0 %v397
      %419 = vmatprep.subr.bf16.mxu0 0
      %420 = vmatpush1.bf16.msra.mxu0 %v398
      %421 = vmatprep.subr.bf16.mxu0 0
      %422 = vmatpush1.bf16.msra.mxu0 %v399
      %423 = vmatprep.subr.bf16.mxu0 0
      %424 = vmatpush1.bf16.msra.mxu0 %v400
      %425 = vmatprep.subr.bf16.mxu0 0
      %426 = vmatpush1.bf16.msra.mxu0 0
      %427 = vmatprep.subr.bf16.mxu0 0
      %428 = vmatpush1.bf16.msra.mxu0 0
      %429 = vmatprep.subr.bf16.mxu0 0
      %430 = vmatpush1.bf16.msra.mxu0 0
      %431 = vmatprep.subr.bf16.mxu0 0
      %432 = vmatpush1.bf16.msra.mxu0 0
      %433 = vmatprep.subr.bf16.mxu0 0
      %434 = vmatpush1.bf16.msra.mxu0 0
      %435 = vmatprep.subr.bf16.mxu0 0
      %436 = vmatpush1.bf16.msra.mxu0 0
      %437 = vmatprep.subr.bf16.mxu0 0
      %438 = vmatpush1.bf16.msra.mxu0 0
      %439 = vmatprep.subr.bf16.mxu0 0
      %440 = vmatpush1.bf16.msra.mxu0 0
      %441 = vmatprep.mubr.bf16.mxu0 0
      %442 = vmatmul.mubr.bf16.gmra.mrb[0].mxu0 %v329
      %v443 = vpop.f32.mrb[0].mxu0
      %v444 = vadd.f32 0.0, %v443
      %v445 = vpop.f32.mrb[0].mxu0
      %v446 = vpop.f32.mrb[0].mxu0
      %v447 = vadd.f32 0.0, %v446
      %v448 = vpop.f32.mrb[0].mxu0
      %449 = vmatprep.mubr.bf16.mxu0 0
      %450 = vmatmul.mubr.bf16.gmra.mrb[0].mxu0 %v330
      %v451 = vpop.f32.mrb[0].mxu0
      %v452 = vadd.f32 0.0, %v451
      %v453 = vpop.f32.mrb[0].mxu0
      %v454 = vpop.f32.mrb[0].mxu0
      %v455 = vadd.f32 0.0, %v454
      %v456 = vpop.f32.mrb[0].mxu0
      %457 = vmatprep.mubr.bf16.mxu0 0
      %458 = vmatmul.mubr.bf16.gmra.mrb[0].mxu0 %v331
      %v459 = vpop.f32.mrb[0].mxu0
      %v460 = vadd.f32 0.0, %v459
      %v461 = vpop.f32.mrb[0].mxu0
      %v462 = vpop.f32.mrb[0].mxu0
      %v463 = vadd.f32 0.0, %v462
      %v464 = vpop.f32.mrb[0].mxu0
      %465 = vmatprep.mubr.bf16.mxu0 0
      %466 = vmatmul.mubr.bf16.gmra.mrb[0].mxu0 %v332
      %v467 = vpop.f32.mrb[0].mxu0
      %v468 = vadd.f32 0.0, %v467
      %v469 = vpop.f32.mrb[0].mxu0
      %v470 = vpop.f32.mrb[0].mxu0
      %v471 = vadd.f32 0.0, %v470
      %v472 = vpop.f32.mrb[0].mxu0
      %473 = vmatprep.mubr.bf16.mxu0 0
      %474 = vmatmul.mubr.bf16.gmra.mrb[0].mxu0 %v333
      %v475 = vpop.f32.mrb[0].mxu0
      %v476 = vadd.f32 0.0, %v475
      %v477 = vpop.f32.mrb[0].mxu0
      %v478 = vpop.f32.mrb[0].mxu0
      %v479 = vadd.f32 0.0, %v478
      %v480 = vpop.f32.mrb[0].mxu0
      %481 = vmatprep.mubr.bf16.mxu0 0
      %482 = vmatmul.mubr.bf16.gmra.mrb[0].mxu0 %v334
      %v483 = vpop.f32.mrb[0].mxu0
      %v484 = vadd.f32 0.0, %v483
      %v485 = vpop.f32.mrb[0].mxu0
      %v486 = vpop.f32.mrb[0].mxu0
      %v487 = vadd.f32 0.0, %v486
      %v488 = vpop.f32.mrb[0].mxu0
      %489 = vmatprep.mubr.bf16.mxu0 0
      %490 = vmatmul.mubr.bf16.gmra.mrb[0].mxu0 %v335
      %v491 = vpop.f32.mrb[0].mxu0
      %v492 = vadd.f32 0.0, %v491
      %v493 = vpop.f32.mrb[0].mxu0
      %v494 = vpop.f32.mrb[0].mxu0
      %v495 = vadd.f32 0.0, %v494
      %v496 = vpop.f32.mrb[0].mxu0
      %497 = vmatprep.mubr.bf16.mxu0 0
      %498 = vmatmul.mubr.bf16.gmra.mrb[0].mxu0 %v336
      %v499 = vpop.f32.mrb[0].mxu0
      %v500 = vadd.f32 0.0, %v499
      %v501 = vpop.f32.mrb[0].mxu0
      %v502 = vpop.f32.mrb[0].mxu0
      %v503 = vadd.f32 0.0, %v502
      %v504 = vpop.f32.mrb[0].mxu0
      %505 = vmatprep.mubr.bf16.mxu0 0
      %506 = vmatmul.mubr.bf16.gmra.mrb[0].mxu0 %v337
      %v507 = vpop.f32.mrb[0].mxu0
      %v508 = vadd.f32 0.0, %v507
      %v509 = vpop.f32.mrb[0].mxu0
      %v510 = vpop.f32.mrb[0].mxu0
      %v511 = vadd.f32 0.0, %v510
      %v512 = vpop.f32.mrb[0].mxu0
      %513 = vmatprep.mubr.bf16.mxu0 0
      %514 = vmatmul.mubr.bf16.gmra.mrb[0].mxu0 %v338
      %v515 = vpop.f32.mrb[0].mxu0
      %v516 = vadd.f32 0.0, %v515
      %v517 = vpop.f32.mrb[0].mxu0
      %v518 = vpop.f32.mrb[0].mxu0
      %v519 = vadd.f32 0.0, %v518
      %v520 = vpop.f32.mrb[0].mxu0
      %521 = vmatprep.mubr.bf16.mxu0 0
      %522 = vmatmul.mubr.bf16.gmra.mrb[0].mxu0 %v339
      %v523 = vpop.f32.mrb[0].mxu0
      %v524 = vadd.f32 0.0, %v523
      %v525 = vpop.f32.mrb[0].mxu0
      %v526 = vpop.f32.mrb[0].mxu0
      %v527 = vadd.f32 0.0, %v526
      %v528 = vpop.f32.mrb[0].mxu0
      %529 = vmatprep.mubr.bf16.mxu0 0
      %530 = vmatmul.mubr.bf16.gmra.mrb[0].mxu0 %v340
      %v531 = vpop.f32.mrb[0].mxu0
      %v532 = vadd.f32 0.0, %v531
      %v533 = vpop.f32.mrb[0].mxu0
      %v534 = vpop.f32.mrb[0].mxu0
      %v535 = vadd.f32 0.0, %v534
      %v536 = vpop.f32.mrb[0].mxu0
      %537 = vmatprep.mubr.bf16.mxu0 0
      %538 = vmatmul.mubr.bf16.gmra.mrb[0].mxu0 %v341
      %v539 = vpop.f32.mrb[0].mxu0
      %v540 = vadd.f32 0.0, %v539
      %v541 = vpop.f32.mrb[0].mxu0
      %v542 = vpop.f32.mrb[0].mxu0
      %v543 = vadd.f32 0.0, %v542
      %v544 = vpop.f32.mrb[0].mxu0
      %545 = vmatprep.mubr.bf16.mxu0 0
      %546 = vmatmul.mubr.bf16.gmra.mrb[0].mxu0 %v342
      %v547 = vpop.f32.mrb[0].mxu0
      %v548 = vadd.f32 0.0, %v547
      %v549 = vpop.f32.mrb[0].mxu0
      %v550 = vpop.f32.mrb[0].mxu0
      %v551 = vadd.f32 0.0, %v550
      %v552 = vpop.f32.mrb[0].mxu0
      %553 = vmatprep.mubr.bf16.mxu0 0
      %554 = vmatmul.mubr.bf16.gmra.mrb[0].mxu0 %v343
      %v555 = vpop.f32.mrb[0].mxu0
      %v556 = vadd.f32 0.0, %v555
      %v557 = vpop.f32.mrb[0].mxu0
      %v558 = vpop.f32.mrb[0].mxu0
      %v559 = vadd.f32 0.0, %v558
      %v560 = vpop.f32.mrb[0].mxu0
      %561 = vmatprep.mubr.bf16.mxu0 0
      %562 = vmatmul.mubr.bf16.gmra.mrb[0].mxu0 %v344
      %v563 = vpop.f32.mrb[0].mxu0
      %v564 = vadd.f32 0.0, %v563
      %v565 = vpop.f32.mrb[0].mxu0
      %v566 = vpop.f32.mrb[0].mxu0
      %v567 = vadd.f32 0.0, %v566
      %v568 = vpop.f32.mrb[0].mxu0
      %569 = vdwg.mxu0
      %v570 = vld [vmem:[#allocation2] sm:$0x1]
      %v571 = vadd.f32 %v444, %v447
      %v572 = vadd.f32 %v571, %v452
      %v573 = vadd.f32 %v572, %v455
      %v574 = vadd.f32 %v573, %v460
      %v575 = vadd.f32 %v574, %v463
      %v576 = vadd.f32 %v575, %v468
      %v577 = vadd.f32 %v576, %v471
      %v578 = vadd.f32 %v577, %v476
      %v579 = vadd.f32 %v578, %v479
      %v580 = vadd.f32 %v579, %v484
      %v581 = vadd.f32 %v580, %v487
      %v582 = vadd.f32 %v581, %v492
      %v583 = vadd.f32 %v582, %v495
      %v584 = vadd.f32 %v583, %v500
      %v585 = vadd.f32 %v584, %v503
      %v586 = vadd.f32 %v585, %v508
      %v587 = vadd.f32 %v586, %v511
      %v588 = vadd.f32 %v587, %v516
      %v589 = vadd.f32 %v588, %v519
      %v590 = vadd.f32 %v589, %v524
      %v591 = vadd.f32 %v590, %v527
      %v592 = vadd.f32 %v591, %v532
      %v593 = vadd.f32 %v592, %v535
      %v594 = vadd.f32 %v593, %v540
      %v595 = vadd.f32 %v594, %v543
      %v596 = vadd.f32 %v595, %v548
      %v597 = vadd.f32 %v596, %v551
      %v598 = vadd.f32 %v597, %v556
      %v599 = vadd.f32 %v598, %v559
      %v600 = vadd.f32 %v599, %v564
      %v601 = vadd.f32 %v600, %v567
      %v602 = vrot.slane %v601, 4
      %v603 = vadd.f32 %v601, %v602
      %v604 = vrot.slane %v603, 2
      %v605 = vadd.f32 %v603, %v604
      %v606 = vrot.slane %v605, 1
      %v607 = vadd.f32 %v605, %v606
      %v608 = vadd.f32 %v570, %v607
      %609 = vst [vmem:[#allocation2] sm:$0x1] %v608
      %v610 = vld [vmem:[#allocation3] sm:$0x1]
      %v611 = vmul.f32 %v444, %v444
      %v612 = vmul.f32 %v447, %v447
      %v613 = vmul.f32 %v452, %v452
      %v614 = vmul.f32 %v455, %v455
      %v615 = vmul.f32 %v460, %v460
      %v616 = vmul.f32 %v463, %v463
      %v617 = vmul.f32 %v468, %v468
      %v618 = vmul.f32 %v471, %v471
      %v619 = vmul.f32 %v476, %v476
      %v620 = vmul.f32 %v479, %v479
      %v621 = vmul.f32 %v484, %v484
      %v622 = vmul.f32 %v487, %v487
      %v623 = vmul.f32 %v492, %v492
      %v624 = vmul.f32 %v495, %v495
      %v625 = vmul.f32 %v500, %v500
      %v626 = vmul.f32 %v503, %v503
      %v627 = vmul.f32 %v508, %v508
      %v628 = vmul.f32 %v511, %v511
      %v629 = vmul.f32 %v516, %v516
      %v630 = vmul.f32 %v519, %v519
      %v631 = vmul.f32 %v524, %v524
      %v632 = vmul.f32 %v527, %v527
      %v633 = vmul.f32 %v532, %v532
      %v634 = vmul.f32 %v535, %v535
      %v635 = vmul.f32 %v540, %v540
      %v636 = vmul.f32 %v543, %v543
      %v637 = vmul.f32 %v548, %v548
      %v638 = vmul.f32 %v551, %v551
      %v639 = vmul.f32 %v556, %v556
      %v640 = vmul.f32 %v559, %v559
      %v641 = vmul.f32 %v564, %v564
      %v642 = vmul.f32 %v567, %v567
      %v643 = vadd.f32 %v611, %v612
      %v644 = vadd.f32 %v643, %v613
      %v645 = vadd.f32 %v644, %v614
      %v646 = vadd.f32 %v645, %v615
      %v647 = vadd.f32 %v646, %v616
      %v648 = vadd.f32 %v647, %v617
      %v649 = vadd.f32 %v648, %v618
      %v650 = vadd.f32 %v649, %v619
      %v651 = vadd.f32 %v650, %v620
      %v652 = vadd.f32 %v651, %v621
      %v653 = vadd.f32 %v652, %v622
      %v654 = vadd.f32 %v653, %v623
      %v655 = vadd.f32 %v654, %v624
      %v656 = vadd.f32 %v655, %v625
      %v657 = vadd.f32 %v656, %v626
      %v658 = vadd.f32 %v657, %v627
      %v659 = vadd.f32 %v658, %v628
      %v660 = vadd.f32 %v659, %v629
      %v661 = vadd.f32 %v660, %v630
      %v662 = vadd.f32 %v661, %v631
      %v663 = vadd.f32 %v662, %v632
      %v664 = vadd.f32 %v663, %v633
      %v665 = vadd.f32 %v664, %v634
      %v666 = vadd.f32 %v665, %v635
      %v667 = vadd.f32 %v666, %v636
      %v668 = vadd.f32 %v667, %v637
      %v669 = vadd.f32 %v668, %v638
      %v670 = vadd.f32 %v669, %v639
      %v671 = vadd.f32 %v670, %v640
      %v672 = vadd.f32 %v671, %v641
      %v673 = vadd.f32 %v672, %v642
      %v674 = vrot.slane %v673, 4
      %v675 = vadd.f32 %v673, %v674
      %v676 = vrot.slane %v675, 2
      %v677 = vadd.f32 %v675, %v676
      %v678 = vrot.slane %v677, 1
      %v679 = vadd.f32 %v677, %v678
      %v680 = vadd.f32 %v610, %v679
      %681 = vst [vmem:[#allocation3] sm:$0x1] %v680
      %p682 = scmp.eq.s32.totalorder %s17, 1
      // Predicated region
      $region41: #{conv_bn_relu.2} parent=35 // pred_check
        %p683 = pneg %p682
      $region42: #{conv_bn_relu.2} parent=35 // pred_check_branch
        %685 = sbr.rel (%p683) target = $region44
      $region43: #{conv_bn_relu.2} parent=35 // pred_region
        %v686 = vld [vmem:[#allocation2] sm:$0x1]
        %v687 = vmul.f32 %v686, 0.0025510204
        %v688 = vld [vmem:[#allocation3] sm:$0x1]
        %v689 = vmul.f32 %v688, 0.0025510204
        %v690 = vmul.f32 %v687, %v687
        %v691 = vsub.f32 %v689, %v690
        %v692 = vmax.f32 %v691, 0.0
        %v693 = vadd.f32 %v692, 0.001
        %v694 = vrsqrt.pop %v693
        %v695 = vld [vmem:[%s2] sm:$0x1]
        %v696 = vmul.f32 %v695, %v694
        %697 = vst [vmem:[%s4] sm:$0x1] %v696
        %v698 = vld [vmem:[%s3] sm:$0x1]
        %v699 = vmul.f32 %v687, %v696
        %v700 = vsub.f32 %v698, %v699
        %701 = vst [vmem:[%s5] sm:$0x1] %v700
      $region44: #{conv_bn_relu.2} parent=35 // pred_fallthru
        _
      // Predicated region
      $region45: #{conv_bn_relu.2} parent=35 // pred_check
        %p702 = pneg %p119
      $region46: #{conv_bn_relu.2} parent=35 // pred_check_branch
        %704 = sbr.rel (%p702) target = $region48
      $region47: #{conv_bn_relu.2} parent=35 // pred_region
        _
      $region48: #{conv_bn_relu.2} parent=35 // pred_fallthru
        _
      // Predicated region
      $region49: #{conv_bn_relu.2} parent=35 // pred_check
        %p705 = pneg %p140
      $region50: #{conv_bn_relu.2} parent=35 // pred_check_branch
        %707 = sbr.rel (%p705) target = $region52
      $region51: #{conv_bn_relu.2} parent=35 // pred_region
        _
      $region52: #{conv_bn_relu.2} parent=35 // pred_fallthru
        _
      // Predicated region
      $region53: #{conv_bn_relu.2} parent=35 // pred_check
        %p708 = pneg %p119
      $region54: #{conv_bn_relu.2} parent=35 // pred_check_branch
        %710 = sbr.rel (%p708) target = $region56
      $region55: #{conv_bn_relu.2} parent=35 // pred_region
        _
      $region56: #{conv_bn_relu.2} parent=35 // pred_fallthru
        _
      // Predicated region
      $region57: #{conv_bn_relu.2} parent=35 // pred_check
        %p711 = pneg %p140
      $region58: #{conv_bn_relu.2} parent=35 // pred_check_branch
        %713 = sbr.rel (%p711) target = $region60
      $region59: #{conv_bn_relu.2} parent=35 // pred_region
        _
      $region60: #{conv_bn_relu.2} parent=35 // pred_fallthru
        _
    $region36: #{conv_bn_relu.2} parent=5 // pred_fallthru
      _
    %p714 = scmp.le.s32.totalorder 2, %s12
    // Predicated region
    $region61: #{conv_bn_relu.2} parent=5 // pred_check
      %p715 = pneg %p714
    $region62: #{conv_bn_relu.2} parent=5 // pred_check_branch
      %717 = sbr.rel (%p715) target = $region64
    $region63: #{conv_bn_relu.2} parent=5 // pred_region
      %s718 = ssub.s32 %s12, 2
    $region64: #{conv_bn_relu.2} parent=5 // pred_fallthru
      _
  $region6: #{conv_bn_relu.2} parent=0 // loop_footer
    %s16 = sadd.s32 1, %s12
  $region7: #{conv_bn_relu.2} parent=0 // loop_footer_branch
    %11 = sbr.rel target = $region3
  $region8: #{conv_bn_relu.2} parent=0 // loop_exit
    _

</llo_original>
